<compile_context>
chip_gen: v7x
topology: tpu7x:2x2x1
jax: 0.10.0
libtpu: 0.0.40
codegen_flags: <defaults>
</compile_context>

<pallas_src>
import jax
import jax.numpy as jnp
import numpy as np
from jax import lax
from jax.experimental import pallas as pl
from jax.experimental.pallas import tpu as pltpu

# ----------------------------- fixed module hyper-params ----------------------
Z_AMORT = 3
NUM_FILTERS = 4
LATENT_DIM = 8
DIM = 32
KSZ = 5
BN_EPS = 1e-5
OUT_LANES = 64                                  # Wo*Cout == 64 for every layer

# per-layer static config: (H_in(=W_in), Cin, Cout)
_LAYERS = ((32, 3, 4), (16, 4, 8), (8, 8, 16))

# ----------------------------- packed-parameter blob layout -------------------
_W_OFF = []
_off = 0
for (_h, _ci, _co) in _LAYERS:
    _W_OFF.append(_off)
    _off += KSZ * _h * _ci                      # 5 row-taps, each (W_in*Cin, 64)
_G_OFF = []
for _ in _LAYERS:
    _G_OFF.append(_off)
    _off += OUT_LANES                           # 64x64 same-channel fold matrix
OFF_HM = _off
_off += OUT_LANES                               # fused pool + (mu|mu|logvar) head matrix
OFF_V = _off
_off += 10                                      # [b,g,be] x 3 layers (lane-tiled) + head bias
TOTAL_ROWS = _off                               # 1386


# ----------------------------- in-kernel conv + BN + ReLU ---------------------
def _conv_bn_relu(prm, pe, po, *, w_off, g_off, v_off, h_out, k, n):
    """One Conv2d(k=5,s=2,p=2) + BatchNorm2d(train stats) + ReLU.

    pe/po : refs (n, h_out+2, k) — padded even / odd input rows (unpadded columns).
    prm   : packed parameter ref (rows, 64).
    Returns (n*h_out, 64) f32, lanes ordered (wo, cout).
    """
    taps = (pe[:, 0:h_out, :], po[:, 0:h_out, :],
            pe[:, 1:h_out + 1, :], po[:, 1:h_out + 1, :],
            pe[:, 2:h_out + 2, :])
    acc = None
    for r in range(KSZ):                        # 5 matmuls, K = W_in*Cin (96/64/64)
        lhs = taps[r].reshape(n * h_out, k).astype(jnp.bfloat16)
        rhs = prm[w_off + r * k: w_off + (r + 1) * k, :].astype(jnp.bfloat16)
        part = jnp.dot(lhs, rhs, preferred_element_type=jnp.float32)
        acc = part if acc is None else acc + part
    acc = acc + prm[v_off:v_off + 1, :]         # conv bias (lane-tiled)

    # BatchNorm (training-mode batch stats, biased variance) — single data pass.
    g = prm[g_off:g_off + OUT_LANES, :]         # same-channel fold, incl. 1/count
    mean = jnp.dot(jnp.sum(acc, axis=0, keepdims=True), g,
                   preferred_element_type=jnp.float32)
    esq = jnp.dot(jnp.sum(acc * acc, axis=0, keepdims=True), g,
                  preferred_element_type=jnp.float32)
    var = esq - mean * mean
    scale = prm[v_off + 1:v_off + 2, :] * lax.rsqrt(var + BN_EPS)   # gamma * rsqrt
    out = (acc - mean) * scale + prm[v_off + 2:v_off + 3, :]        # + beta
    return jnp.maximum(out, 0.0)


# ----------------------------- fused encoder kernel ---------------------------
def _encoder_kernel(pe1_ref, po1_ref, prm_ref, out_ref, pe2, po2, pe3, po3):
    n = pe1_ref.shape[0]
    zrow = jnp.zeros((n, 1, OUT_LANES), jnp.float32)

    # ---- layer 1: 3x32x32 -> 4x16x16 ----
    a1 = _conv_bn_relu(prm_ref, pe1_ref, po1_ref,
                       w_off=_W_OFF[0], g_off=_G_OFF[0], v_off=OFF_V + 0,
                       h_out=16, k=32 * 3, n=n)                 # (n*16, 64)

    # row-parity split for layer 2; zero only the border rows (1 row each side)
    a1p = a1.reshape(n, 8, 2, OUT_LANES)
    pe2[:, 0:1, :] = zrow
    pe2[:, 9:10, :] = zrow
    pe2[:, 1:9, :] = a1p[:, :, 0, :]
    po2[:, 0:1, :] = zrow
    po2[:, 9:10, :] = zrow
    po2[:, 1:9, :] = a1p[:, :, 1, :]

    # ---- layer 2: 4x16x16 -> 8x8x8 ----
    a2 = _conv_bn_relu(prm_ref, pe2, po2,
                       w_off=_W_OFF[1], g_off=_G_OFF[1], v_off=OFF_V + 3,
                       h_out=8, k=16 * 4, n=n)                  # (n*8, 64)

    a2p = a2.reshape(n, 4, 2, OUT_LANES)
    pe3[:, 0:1, :] = zrow
    pe3[:, 5:6, :] = zrow
    pe3[:, 1:5, :] = a2p[:, :, 0, :]
    po3[:, 0:1, :] = zrow
    po3[:, 5:6, :] = zrow
    po3[:, 1:5, :] = a2p[:, :, 1, :]

    # ---- layer 3: 8x8x8 -> 16x4x4 ----
    a3 = _conv_bn_relu(prm_ref, pe3, po3,
                       w_off=_W_OFF[2], g_off=_G_OFF[2], v_off=OFF_V + 6,
                       h_out=4, k=8 * 8, n=n)                   # (n*4, 64)

    # ---- AvgPool2d(4) + Flatten + both Gaussian heads fused into one matmul ----
    a3r = a3.reshape(n, 4, OUT_LANES)
    psum = a3r[:, 0, :] + a3r[:, 1, :] + a3r[:, 2, :] + a3r[:, 3, :]      # (n, 64)
    head = jnp.dot(psum, prm_ref[OFF_HM:OFF_HM + OUT_LANES, :],
                   preferred_element_type=jnp.float32) \
        + prm_ref[OFF_V + 9:OFF_V + 10, :]                                # (n, 64)
    lane = lax.broadcasted_iota(jnp.int32, head.shape, 1)
    # lanes [0:8) = tanh(mu) = tanh(z0), [8:16) = mu, [16:24) = logvar, rest unused.
    # TODO(synk): stochastic=True reparameterized sampling (z0 = mu + eps*exp(0.5*logvar))
    #             is not implemented; deterministic z0 = mu path is used.
    out_ref[...] = jnp.where(lane < LATENT_DIM, jnp.tanh(head), head)


# ----------------------------- parameter packing ------------------------------
def _banded_weight(w_hwio, w_in):
    """(5,5,Cin,Cout) conv weight -> (5*W_in*Cin, W_out*Cout) banded matrices (row-tap major).

    Folds the kw taps, column zero-padding and the column stride-2 into the matrix:
    result[r*W_in*Cin + win*Cin + ci, wo*Cout + co] = w[r, win - 2*wo + 2, ci, co] (0 elsewhere).
    """
    _, _, cin, cout = w_hwio.shape
    w_out = w_in // 2
    win = np.arange(w_in)
    wo = np.arange(w_out)
    kw = win[:, None] - 2 * wo[None, :] + 2                     # (W_in, W_out)
    valid = ((kw >= 0) & (kw < KSZ)).astype(np.float32)
    kw_c = np.clip(kw, 0, KSZ - 1)
    m = w_hwio[:, kw_c, :, :] * valid[None, :, :, None, None]   # (5, W_in, W_out, Cin, Cout)
    m = jnp.transpose(m, (0, 1, 3, 2, 4))                       # (5, W_in, Cin, W_out, Cout)
    return m.reshape(KSZ * w_in * cin, w_out * cout)


def _group_matrix(cout, count):
    """(64,64): 1/count where lanes belong to the same channel (lane % Cout), else 0."""
    l = np.arange(OUT_LANES)
    g = (l[:, None] % cout == l[None, :] % cout).astype(np.float32) / float(count)
    return jnp.asarray(g)


def pack_params(P, batch):
    """Pack every parameter / constant into one (TOTAL_ROWS, 64) f32 blob."""
    blocks = []
    for li, (h, _ci, _co) in enumerate(_LAYERS):
        blocks.append(_banded_weight(P[f"w{li + 1}"], h))
    for _li, (h, _ci, co) in enumerate(_LAYERS):
        ho = h // 2
        blocks.append(_group_matrix(co, batch * ho * ho))
    # fused AvgPool(4x4, 1/16) + [Wmu | Wmu | Wlv] head matrix, padded to 64 lanes
    wh = jnp.concatenate([P["wmu"], P["wmu"], P["wlv"]], axis=1)          # (16, 24)
    hm = jnp.pad(jnp.tile(wh, (4, 1)) / 16.0,
                 ((0, 0), (0, OUT_LANES - 3 * LATENT_DIM)))               # (64, 64)
    blocks.append(hm)
    vec_rows = []
    for li, (h, _ci, _co) in enumerate(_LAYERS):
        rep = h // 2
        vec_rows += [jnp.tile(P[f"b{li + 1}"], rep),
                     jnp.tile(P[f"g{li + 1}"], rep),
                     jnp.tile(P[f"be{li + 1}"], rep)]
        # each row is lane-tiled to (wo, cout) order => 64 lanes
    vec_rows.append(jnp.concatenate([P["bmu"], P["bmu"], P["blv"],
                                     jnp.zeros(OUT_LANES - 3 * LATENT_DIM, jnp.float32)]))
    blocks.append(jnp.stack(vec_rows, axis=0))                            # (10, 64)
    blob = jnp.concatenate([b.astype(jnp.float32) for b in blocks], axis=0)
    assert blob.shape == (TOTAL_ROWS, OUT_LANES), blob.shape
    return blob


# ----------------------------- wrapper -----------------------------------------
def latent_state_encoder_forward(x, packed):
    """x: [B, GenLen*NumChannels, 32, 32] -> (z0, z_means, z_logvs), each [B, latent_dim]."""
    B = x.shape[0]
    xs = x[:, :Z_AMORT].astype(jnp.float32)                               # (B, 3, 32, 32)
    # lane-dense row layout (B, H, W*C); row-parity (stride-2 phase) split + 1 zero border row
    xr = jnp.transpose(xs, (0, 2, 3, 1)).reshape(B, DIM, DIM * Z_AMORT)   # (B, 32, 96)
    zrow = jnp.zeros((B, 1, DIM * Z_AMORT), jnp.float32)
    pe1 = jnp.concatenate([zrow, xr[:, 0::2, :], zrow], axis=1)           # (B, 18, 96)
    po1 = jnp.concatenate([zrow, xr[:, 1::2, :], zrow], axis=1)           # (B, 18, 96)

    vmem = lambda: pl.BlockSpec(memory_space=pltpu.MemorySpace.VMEM)
    out = pl.pallas_call(
        _encoder_kernel,
        out_shape=jax.ShapeDtypeStruct((B, OUT_LANES), jnp.float32),
        in_specs=[vmem(), vmem(), vmem()],
        out_specs=vmem(),
        scratch_shapes=[
            pltpu.VMEM((B, 10, OUT_LANES), jnp.float32),   # layer-2 padded even rows
            pltpu.VMEM((B, 10, OUT_LANES), jnp.float32),   # layer-2 padded odd rows
            pltpu.VMEM((B, 6, OUT_LANES), jnp.float32),    # layer-3 padded even rows
            pltpu.VMEM((B, 6, OUT_LANES), jnp.float32),    # layer-3 padded odd rows
        ],
        compiler_params=pltpu.CompilerParams(vmem_limit_bytes=16 * 1024 * 1024),
    )(pe1, po1, packed)

    z0 = out[:, :LATENT_DIM]
    mu = out[:, LATENT_DIM:2 * LATENT_DIM]
    lv = out[:, 2 * LATENT_DIM:3 * LATENT_DIM]
    return z0, mu, lv


# ----------------------------- params -------------------------------------------
def init_params(key):
    ks = jax.random.split(key, 16)
    nrm = lambda k, s: 0.1 * jax.random.normal(k, s, jnp.float32)
    F1, F2, F3 = NUM_FILTERS, NUM_FILTERS * 2, NUM_FILTERS * 4
    P = {}
    P["w1"] = nrm(ks[0], (KSZ, KSZ, Z_AMORT, F1)); P["b1"] = nrm(ks[1], (F1,))
    P["g1"] = 1.0 + nrm(ks[2], (F1,));             P["be1"] = nrm(ks[3], (F1,))
    P["w2"] = nrm(ks[4], (KSZ, KSZ, F1, F2));      P["b2"] = nrm(ks[5], (F2,))
    P["g2"] = 1.0 + nrm(ks[6], (F2,));             P["be2"] = nrm(ks[7], (F2,))
    P["w3"] = nrm(ks[8], (KSZ, KSZ, F2, F3));      P["b3"] = nrm(ks[9], (F3,))
    P["g3"] = 1.0 + nrm(ks[10], (F3,));            P["be3"] = nrm(ks[11], (F3,))
    P["wmu"] = nrm(ks[12], (F3, LATENT_DIM));      P["bmu"] = nrm(ks[13], (LATENT_DIM,))
    P["wlv"] = nrm(ks[14], (F3, LATENT_DIM));      P["blv"] = nrm(ks[15], (LATENT_DIM,))
    return P


# ----------------------------- pure-JAX reference --------------------------------
def ref_forward(x, P):
    xs = x[:, :Z_AMORT].astype(jnp.float32)                   # NCHW

    def conv(h, w_hwio, b):
        w_oihw = jnp.transpose(w_hwio, (3, 2, 0, 1))
        y = lax.conv_general_dilated(
            h, w_oihw, window_strides=(2, 2), padding=[(2, 2), (2, 2)],
            dimension_numbers=("NCHW", "OIHW", "NCHW"),
            precision=lax.Precision.HIGHEST)
        return y + b.reshape(1, -1, 1, 1)

    def bn_relu(h, g, b):
        mean = h.mean(axis=(0, 2, 3), keepdims=True)
        var = ((h - mean) ** 2).mean(axis=(0, 2, 3), keepdims=True)
        y = (h - mean) * lax.rsqrt(var + BN_EPS) * g.reshape(1, -1, 1, 1) \
            + b.reshape(1, -1, 1, 1)
        return jnp.maximum(y, 0.0)

    h = bn_relu(conv(xs, P["w1"], P["b1"]), P["g1"], P["be1"])
    h = bn_relu(conv(h, P["w2"], P["b2"]), P["g2"], P["be2"])
    h = bn_relu(conv(h, P["w3"], P["b3"]), P["g3"], P["be3"])
    pooled = h.mean(axis=(2, 3))                              # AvgPool2d(4) + Flatten on 4x4
    mu = pooled @ P["wmu"] + P["bmu"]
    lv = pooled @ P["wlv"] + P["blv"]
    return jnp.tanh(mu), mu, lv


# ----------------------------- main -----------------------------------------------
if __name__ == "__main__":
    key = jax.random.PRNGKey(0)
    pkey, xkey = jax.random.split(key)
    P = init_params(pkey)

    B, T_TOTAL = 2, 5
    x = jax.random.normal(xkey, (B, T_TOTAL, DIM, DIM), jnp.float32)

    packed = pack_params(P, B)                               # one-time parameter packing
    fwd = jax.jit(latent_state_encoder_forward)
    z0, mu, lv = fwd(x, packed)
    jax.block_until_ready((z0, mu, lv))
    assert z0.shape == (B, LATENT_DIM), z0.shape

    z0_r, mu_r, lv_r = ref_forward(x, P)
    np.testing.assert_allclose(np.asarray(z0), np.asarray(z0_r), rtol=2e-2, atol=2e-2)
    np.testing.assert_allclose(np.asarray(mu), np.asarray(mu_r), rtol=2e-2, atol=2e-2)
    np.testing.assert_allclose(np.asarray(lv), np.asarray(lv_r), rtol=2e-2, atol=2e-2)
    print("KERNEL_OK")
</pallas_src>

<mosaic_0001>
module attributes {stable_mosaic.version = 11 : i64} {
  func.func @_encoder_kernel(%arg0: memref<2x18x96xf32, #tpu.memory_space<vmem>>, %arg1: memref<2x18x96xf32, #tpu.memory_space<vmem>>, %arg2: memref<1386x64xf32, #tpu.memory_space<vmem>>, %arg3: memref<2x64xf32, #tpu.memory_space<vmem>>, %arg4: memref<2x10x64xf32, #tpu.memory_space<vmem>>, %arg5: memref<2x10x64xf32, #tpu.memory_space<vmem>>, %arg6: memref<2x6x64xf32, #tpu.memory_space<vmem>>, %arg7: memref<2x6x64xf32, #tpu.memory_space<vmem>>) attributes {dimension_semantics = [], scalar_prefetch = 0 : i64, scratch_operands = 4 : i64, tpu.core_type = #tpu.core_type<tc>} {
    %cst = arith.constant 0.000000e+00 : f32
    %0 = vector.broadcast %cst : f32 to vector<2x1x64xf32>
    %c0 = arith.constant 0 : index
    %c0_0 = arith.constant 0 : index
    %c0_1 = arith.constant 0 : index
    %1 = vector.load %arg0[%c0, %c0_0, %c0_1] : memref<2x18x96xf32, #tpu.memory_space<vmem>>, vector<2x16x96xf32>
    %c0_2 = arith.constant 0 : index
    %c0_3 = arith.constant 0 : index
    %c0_4 = arith.constant 0 : index
    %2 = vector.load %arg1[%c0_2, %c0_3, %c0_4] : memref<2x18x96xf32, #tpu.memory_space<vmem>>, vector<2x16x96xf32>
    %c0_5 = arith.constant 0 : index
    %c1 = arith.constant 1 : index
    %c0_6 = arith.constant 0 : index
    %3 = vector.load %arg0[%c0_5, %c1, %c0_6] : memref<2x18x96xf32, #tpu.memory_space<vmem>>, vector<2x16x96xf32>
    %c0_7 = arith.constant 0 : index
    %c1_8 = arith.constant 1 : index
    %c0_9 = arith.constant 0 : index
    %4 = vector.load %arg1[%c0_7, %c1_8, %c0_9] : memref<2x18x96xf32, #tpu.memory_space<vmem>>, vector<2x16x96xf32>
    %c0_10 = arith.constant 0 : index
    %c2 = arith.constant 2 : index
    %c0_11 = arith.constant 0 : index
    %5 = vector.load %arg0[%c0_10, %c2, %c0_11] : memref<2x18x96xf32, #tpu.memory_space<vmem>>, vector<2x16x96xf32>
    %6 = vector.shape_cast %1 : vector<2x16x96xf32> to vector<32x96xf32>
    %7 = arith.truncf %6 : vector<32x96xf32> to vector<32x96xbf16>
    %c0_12 = arith.constant 0 : index
    %c0_13 = arith.constant 0 : index
    %8 = vector.load %arg2[%c0_12, %c0_13] : memref<1386x64xf32, #tpu.memory_space<vmem>>, vector<96x64xf32>
    %9 = arith.truncf %8 : vector<96x64xf32> to vector<96x64xbf16>
    %cst_14 = arith.constant dense<0.000000e+00> : vector<32x64xf32>
    %10 = tpu.matmul %7, %9, %cst_14 {dimension_numbers = #tpu.dot_dimension_numbers<[1], [0], [0], [1], [0, 0, 1, 1], [], []>} : vector<32x96xbf16>, vector<96x64xbf16>, vector<32x64xf32> -> vector<32x64xf32>
    %11 = vector.shape_cast %2 : vector<2x16x96xf32> to vector<32x96xf32>
    %12 = arith.truncf %11 : vector<32x96xf32> to vector<32x96xbf16>
    %c96 = arith.constant 96 : index
    %c0_15 = arith.constant 0 : index
    %13 = vector.load %arg2[%c96, %c0_15] : memref<1386x64xf32, #tpu.memory_space<vmem>>, vector<96x64xf32>
    %14 = arith.truncf %13 : vector<96x64xf32> to vector<96x64xbf16>
    %cst_16 = arith.constant dense<0.000000e+00> : vector<32x64xf32>
    %15 = tpu.matmul %12, %14, %cst_16 {dimension_numbers = #tpu.dot_dimension_numbers<[1], [0], [0], [1], [0, 0, 1, 1], [], []>} : vector<32x96xbf16>, vector<96x64xbf16>, vector<32x64xf32> -> vector<32x64xf32>
    %16 = arith.addf %10, %15 : vector<32x64xf32>
    %17 = vector.shape_cast %3 : vector<2x16x96xf32> to vector<32x96xf32>
    %18 = arith.truncf %17 : vector<32x96xf32> to vector<32x96xbf16>
    %c192 = arith.constant 192 : index
    %c0_17 = arith.constant 0 : index
    %19 = vector.load %arg2[%c192, %c0_17] : memref<1386x64xf32, #tpu.memory_space<vmem>>, vector<96x64xf32>
    %20 = arith.truncf %19 : vector<96x64xf32> to vector<96x64xbf16>
    %cst_18 = arith.constant dense<0.000000e+00> : vector<32x64xf32>
    %21 = tpu.matmul %18, %20, %cst_18 {dimension_numbers = #tpu.dot_dimension_numbers<[1], [0], [0], [1], [0, 0, 1, 1], [], []>} : vector<32x96xbf16>, vector<96x64xbf16>, vector<32x64xf32> -> vector<32x64xf32>
    %22 = arith.addf %16, %21 : vector<32x64xf32>
    %23 = vector.shape_cast %4 : vector<2x16x96xf32> to vector<32x96xf32>
    %24 = arith.truncf %23 : vector<32x96xf32> to vector<32x96xbf16>
    %c288 = arith.constant 288 : index
    %c0_19 = arith.constant 0 : index
    %25 = vector.load %arg2[%c288, %c0_19] : memref<1386x64xf32, #tpu.memory_space<vmem>>, vector<96x64xf32>
    %26 = arith.truncf %25 : vector<96x64xf32> to vector<96x64xbf16>
    %cst_20 = arith.constant dense<0.000000e+00> : vector<32x64xf32>
    %27 = tpu.matmul %24, %26, %cst_20 {dimension_numbers = #tpu.dot_dimension_numbers<[1], [0], [0], [1], [0, 0, 1, 1], [], []>} : vector<32x96xbf16>, vector<96x64xbf16>, vector<32x64xf32> -> vector<32x64xf32>
    %28 = arith.addf %22, %27 : vector<32x64xf32>
    %29 = vector.shape_cast %5 : vector<2x16x96xf32> to vector<32x96xf32>
    %30 = arith.truncf %29 : vector<32x96xf32> to vector<32x96xbf16>
    %c384 = arith.constant 384 : index
    %c0_21 = arith.constant 0 : index
    %31 = vector.load %arg2[%c384, %c0_21] : memref<1386x64xf32, #tpu.memory_space<vmem>>, vector<96x64xf32>
    %32 = arith.truncf %31 : vector<96x64xf32> to vector<96x64xbf16>
    %cst_22 = arith.constant dense<0.000000e+00> : vector<32x64xf32>
    %33 = tpu.matmul %30, %32, %cst_22 {dimension_numbers = #tpu.dot_dimension_numbers<[1], [0], [0], [1], [0, 0, 1, 1], [], []>} : vector<32x96xbf16>, vector<96x64xbf16>, vector<32x64xf32> -> vector<32x64xf32>
    %34 = arith.addf %28, %33 : vector<32x64xf32>
    %c1376 = arith.constant 1376 : index
    %c0_23 = arith.constant 0 : index
    %35 = vector.load %arg2[%c1376, %c0_23] : memref<1386x64xf32, #tpu.memory_space<vmem>>, vector<1x64xf32>
    %36 = vector.broadcast %35 : vector<1x64xf32> to vector<32x64xf32>
    %37 = arith.addf %34, %36 : vector<32x64xf32>
    %c1120 = arith.constant 1120 : index
    %c0_24 = arith.constant 0 : index
    %38 = vector.load %arg2[%c1120, %c0_24] : memref<1386x64xf32, #tpu.memory_space<vmem>>, vector<64x64xf32>
    %cst_25 = arith.constant dense<0.000000e+00> : vector<64xf32>
    %39 = vector.multi_reduction <add>, %37, %cst_25 [0] : vector<32x64xf32> to vector<64xf32>
    %40 = vector.shape_cast %39 : vector<64xf32> to vector<1x64xf32>
    %cst_26 = arith.constant dense<0.000000e+00> : vector<1x64xf32>
    %41 = tpu.matmul %40, %38, %cst_26 {dimension_numbers = #tpu.dot_dimension_numbers<[1], [0], [0], [1], [0, 0, 1, 1], [], []>} : vector<1x64xf32>, vector<64x64xf32>, vector<1x64xf32> -> vector<1x64xf32>
    %42 = arith.mulf %37, %37 : vector<32x64xf32>
    %cst_27 = arith.constant dense<0.000000e+00> : vector<64xf32>
    %43 = vector.multi_reduction <add>, %42, %cst_27 [0] : vector<32x64xf32> to vector<64xf32>
    %44 = vector.shape_cast %43 : vector<64xf32> to vector<1x64xf32>
    %cst_28 = arith.constant dense<0.000000e+00> : vector<1x64xf32>
    %45 = tpu.matmul %44, %38, %cst_28 {dimension_numbers = #tpu.dot_dimension_numbers<[1], [0], [0], [1], [0, 0, 1, 1], [], []>} : vector<1x64xf32>, vector<64x64xf32>, vector<1x64xf32> -> vector<1x64xf32>
    %46 = arith.mulf %41, %41 : vector<1x64xf32>
    %47 = arith.subf %45, %46 : vector<1x64xf32>
    %c1377 = arith.constant 1377 : index
    %c0_29 = arith.constant 0 : index
    %48 = vector.load %arg2[%c1377, %c0_29] : memref<1386x64xf32, #tpu.memory_space<vmem>>, vector<1x64xf32>
    %cst_30 = arith.constant 9.99999974E-6 : f32
    %49 = vector.broadcast %cst_30 : f32 to vector<1x64xf32>
    %50 = arith.addf %47, %49 : vector<1x64xf32>
    %51 = math.rsqrt %50 : vector<1x64xf32>
    %52 = arith.mulf %48, %51 : vector<1x64xf32>
    %53 = vector.broadcast %41 : vector<1x64xf32> to vector<32x64xf32>
    %54 = arith.subf %37, %53 : vector<32x64xf32>
    %55 = vector.broadcast %52 : vector<1x64xf32> to vector<32x64xf32>
    %56 = arith.mulf %54, %55 : vector<32x64xf32>
    %c1378 = arith.constant 1378 : index
    %c0_31 = arith.constant 0 : index
    %57 = vector.load %arg2[%c1378, %c0_31] : memref<1386x64xf32, #tpu.memory_space<vmem>>, vector<1x64xf32>
    %58 = vector.broadcast %57 : vector<1x64xf32> to vector<32x64xf32>
    %59 = arith.addf %56, %58 : vector<32x64xf32>
    %cst_32 = arith.constant 0.000000e+00 : f32
    %60 = vector.broadcast %cst_32 : f32 to vector<32x64xf32>
    %61 = arith.maximumf %59, %60 : vector<32x64xf32>
    %62 = vector.shape_cast %61 : vector<32x64xf32> to vector<2x8x2x64xf32>
    %c0_33 = arith.constant 0 : index
    %c0_34 = arith.constant 0 : index
    %c0_35 = arith.constant 0 : index
    %63 = vector.load %arg4[%c0_33, %c0_34, %c0_35] : memref<2x10x64xf32, #tpu.memory_space<vmem>>, vector<2x1x64xf32>
    tpu.vector_store %arg4[%c0_33, %c0_34, %c0_35], %0 {strides = array<i32>} : memref<2x10x64xf32, #tpu.memory_space<vmem>>, vector<2x1x64xf32>,
    %c0_36 = arith.constant 0 : index
    %c9 = arith.constant 9 : index
    %c0_37 = arith.constant 0 : index
    %64 = vector.load %arg4[%c0_36, %c9, %c0_37] : memref<2x10x64xf32, #tpu.memory_space<vmem>>, vector<2x1x64xf32>
    tpu.vector_store %arg4[%c0_36, %c9, %c0_37], %0 {strides = array<i32>} : memref<2x10x64xf32, #tpu.memory_space<vmem>>, vector<2x1x64xf32>,
    %65 = vector.extract_strided_slice %62 {offsets = [0, 0, 0, 0], sizes = [2, 8, 1, 64], strides = [1, 1, 1, 1]} : vector<2x8x2x64xf32> to vector<2x8x1x64xf32>
    %66 = vector.shape_cast %65 : vector<2x8x1x64xf32> to vector<2x8x64xf32>
    %c0_38 = arith.constant 0 : index
    %c1_39 = arith.constant 1 : index
    %c0_40 = arith.constant 0 : index
    %67 = vector.load %arg4[%c0_38, %c1_39, %c0_40] : memref<2x10x64xf32, #tpu.memory_space<vmem>>, vector<2x8x64xf32>
    tpu.vector_store %arg4[%c0_38, %c1_39, %c0_40], %66 {strides = array<i32>} : memref<2x10x64xf32, #tpu.memory_space<vmem>>, vector<2x8x64xf32>,
    %c0_41 = arith.constant 0 : index
    %c0_42 = arith.constant 0 : index
    %c0_43 = arith.constant 0 : index
    %68 = vector.load %arg5[%c0_41, %c0_42, %c0_43] : memref<2x10x64xf32, #tpu.memory_space<vmem>>, vector<2x1x64xf32>
    tpu.vector_store %arg5[%c0_41, %c0_42, %c0_43], %0 {strides = array<i32>} : memref<2x10x64xf32, #tpu.memory_space<vmem>>, vector<2x1x64xf32>,
    %c0_44 = arith.constant 0 : index
    %c9_45 = arith.constant 9 : index
    %c0_46 = arith.constant 0 : index
    %69 = vector.load %arg5[%c0_44, %c9_45, %c0_46] : memref<2x10x64xf32, #tpu.memory_space<vmem>>, vector<2x1x64xf32>
    tpu.vector_store %arg5[%c0_44, %c9_45, %c0_46], %0 {strides = array<i32>} : memref<2x10x64xf32, #tpu.memory_space<vmem>>, vector<2x1x64xf32>,
    %70 = vector.extract_strided_slice %62 {offsets = [0, 0, 1, 0], sizes = [2, 8, 1, 64], strides = [1, 1, 1, 1]} : vector<2x8x2x64xf32> to vector<2x8x1x64xf32>
    %71 = vector.shape_cast %70 : vector<2x8x1x64xf32> to vector<2x8x64xf32>
    %c0_47 = arith.constant 0 : index
    %c1_48 = arith.constant 1 : index
    %c0_49 = arith.constant 0 : index
    %72 = vector.load %arg5[%c0_47, %c1_48, %c0_49] : memref<2x10x64xf32, #tpu.memory_space<vmem>>, vector<2x8x64xf32>
    tpu.vector_store %arg5[%c0_47, %c1_48, %c0_49], %71 {strides = array<i32>} : memref<2x10x64xf32, #tpu.memory_space<vmem>>, vector<2x8x64xf32>,
    %c0_50 = arith.constant 0 : index
    %c0_51 = arith.constant 0 : index
    %c0_52 = arith.constant 0 : index
    %73 = vector.load %arg4[%c0_50, %c0_51, %c0_52] : memref<2x10x64xf32, #tpu.memory_space<vmem>>, vector<2x8x64xf32>
    %c0_53 = arith.constant 0 : index
    %c0_54 = arith.constant 0 : index
    %c0_55 = arith.constant 0 : index
    %74 = vector.load %arg5[%c0_53, %c0_54, %c0_55] : memref<2x10x64xf32, #tpu.memory_space<vmem>>, vector<2x8x64xf32>
    %c0_56 = arith.constant 0 : index
    %c1_57 = arith.constant 1 : index
    %c0_58 = arith.constant 0 : index
    %75 = vector.load %arg4[%c0_56, %c1_57, %c0_58] : memref<2x10x64xf32, #tpu.memory_space<vmem>>, vector<2x8x64xf32>
    %c0_59 = arith.constant 0 : index
    %c1_60 = arith.constant 1 : index
    %c0_61 = arith.constant 0 : index
    %76 = vector.load %arg5[%c0_59, %c1_60, %c0_61] : memref<2x10x64xf32, #tpu.memory_space<vmem>>, vector<2x8x64xf32>
    %c0_62 = arith.constant 0 : index
    %c2_63 = arith.constant 2 : index
    %c0_64 = arith.constant 0 : index
    %77 = vector.load %arg4[%c0_62, %c2_63, %c0_64] : memref<2x10x64xf32, #tpu.memory_space<vmem>>, vector<2x8x64xf32>
    %78 = vector.shape_cast %73 : vector<2x8x64xf32> to vector<16x64xf32>
    %79 = arith.truncf %78 : vector<16x64xf32> to vector<16x64xbf16>
    %c480 = arith.constant 480 : index
    %c0_65 = arith.constant 0 : index
    %80 = vector.load %arg2[%c480, %c0_65] : memref<1386x64xf32, #tpu.memory_space<vmem>>, vector<64x64xf32>
    %81 = arith.truncf %80 : vector<64x64xf32> to vector<64x64xbf16>
    %cst_66 = arith.constant dense<0.000000e+00> : vector<16x64xf32>
    %82 = tpu.matmul %79, %81, %cst_66 {dimension_numbers = #tpu.dot_dimension_numbers<[1], [0], [0], [1], [0, 0, 1, 1], [], []>} : vector<16x64xbf16>, vector<64x64xbf16>, vector<16x64xf32> -> vector<16x64xf32>
    %83 = vector.shape_cast %74 : vector<2x8x64xf32> to vector<16x64xf32>
    %84 = arith.truncf %83 : vector<16x64xf32> to vector<16x64xbf16>
    %c544 = arith.constant 544 : index
    %c0_67 = arith.constant 0 : index
    %85 = vector.load %arg2[%c544, %c0_67] : memref<1386x64xf32, #tpu.memory_space<vmem>>, vector<64x64xf32>
    %86 = arith.truncf %85 : vector<64x64xf32> to vector<64x64xbf16>
    %cst_68 = arith.constant dense<0.000000e+00> : vector<16x64xf32>
    %87 = tpu.matmul %84, %86, %cst_68 {dimension_numbers = #tpu.dot_dimension_numbers<[1], [0], [0], [1], [0, 0, 1, 1], [], []>} : vector<16x64xbf16>, vector<64x64xbf16>, vector<16x64xf32> -> vector<16x64xf32>
    %88 = arith.addf %82, %87 : vector<16x64xf32>
    %89 = vector.shape_cast %75 : vector<2x8x64xf32> to vector<16x64xf32>
    %90 = arith.truncf %89 : vector<16x64xf32> to vector<16x64xbf16>
    %c608 = arith.constant 608 : index
    %c0_69 = arith.constant 0 : index
    %91 = vector.load %arg2[%c608, %c0_69] : memref<1386x64xf32, #tpu.memory_space<vmem>>, vector<64x64xf32>
    %92 = arith.truncf %91 : vector<64x64xf32> to vector<64x64xbf16>
    %cst_70 = arith.constant dense<0.000000e+00> : vector<16x64xf32>
    %93 = tpu.matmul %90, %92, %cst_70 {dimension_numbers = #tpu.dot_dimension_numbers<[1], [0], [0], [1], [0, 0, 1, 1], [], []>} : vector<16x64xbf16>, vector<64x64xbf16>, vector<16x64xf32> -> vector<16x64xf32>
    %94 = arith.addf %88, %93 : vector<16x64xf32>
    %95 = vector.shape_cast %76 : vector<2x8x64xf32> to vector<16x64xf32>
    %96 = arith.truncf %95 : vector<16x64xf32> to vector<16x64xbf16>
    %c672 = arith.constant 672 : index
    %c0_71 = arith.constant 0 : index
    %97 = vector.load %arg2[%c672, %c0_71] : memref<1386x64xf32, #tpu.memory_space<vmem>>, vector<64x64xf32>
    %98 = arith.truncf %97 : vector<64x64xf32> to vector<64x64xbf16>
    %cst_72 = arith.constant dense<0.000000e+00> : vector<16x64xf32>
    %99 = tpu.matmul %96, %98, %cst_72 {dimension_numbers = #tpu.dot_dimension_numbers<[1], [0], [0], [1], [0, 0, 1, 1], [], []>} : vector<16x64xbf16>, vector<64x64xbf16>, vector<16x64xf32> -> vector<16x64xf32>
    %100 = arith.addf %94, %99 : vector<16x64xf32>
    %101 = vector.shape_cast %77 : vector<2x8x64xf32> to vector<16x64xf32>
    %102 = arith.truncf %101 : vector<16x64xf32> to vector<16x64xbf16>
    %c736 = arith.constant 736 : index
    %c0_73 = arith.constant 0 : index
    %103 = vector.load %arg2[%c736, %c0_73] : memref<1386x64xf32, #tpu.memory_space<vmem>>, vector<64x64xf32>
    %104 = arith.truncf %103 : vector<64x64xf32> to vector<64x64xbf16>
    %cst_74 = arith.constant dense<0.000000e+00> : vector<16x64xf32>
    %105 = tpu.matmul %102, %104, %cst_74 {dimension_numbers = #tpu.dot_dimension_numbers<[1], [0], [0], [1], [0, 0, 1, 1], [], []>} : vector<16x64xbf16>, vector<64x64xbf16>, vector<16x64xf32> -> vector<16x64xf32>
    %106 = arith.addf %100, %105 : vector<16x64xf32>
    %c1379 = arith.constant 1379 : index
    %c0_75 = arith.constant 0 : index
    %107 = vector.load %arg2[%c1379, %c0_75] : memref<1386x64xf32, #tpu.memory_space<vmem>>, vector<1x64xf32>
    %108 = vector.broadcast %107 : vector<1x64xf32> to vector<16x64xf32>
    %109 = arith.addf %106, %108 : vector<16x64xf32>
    %c1184 = arith.constant 1184 : index
    %c0_76 = arith.constant 0 : index
    %110 = vector.load %arg2[%c1184, %c0_76] : memref<1386x64xf32, #tpu.memory_space<vmem>>, vector<64x64xf32>
    %cst_77 = arith.constant dense<0.000000e+00> : vector<64xf32>
    %111 = vector.multi_reduction <add>, %109, %cst_77 [0] : vector<16x64xf32> to vector<64xf32>
    %112 = vector.shape_cast %111 : vector<64xf32> to vector<1x64xf32>
    %cst_78 = arith.constant dense<0.000000e+00> : vector<1x64xf32>
    %113 = tpu.matmul %112, %110, %cst_78 {dimension_numbers = #tpu.dot_dimension_numbers<[1], [0], [0], [1], [0, 0, 1, 1], [], []>} : vector<1x64xf32>, vector<64x64xf32>, vector<1x64xf32> -> vector<1x64xf32>
    %114 = arith.mulf %109, %109 : vector<16x64xf32>
    %cst_79 = arith.constant dense<0.000000e+00> : vector<64xf32>
    %115 = vector.multi_reduction <add>, %114, %cst_79 [0] : vector<16x64xf32> to vector<64xf32>
    %116 = vector.shape_cast %115 : vector<64xf32> to vector<1x64xf32>
    %cst_80 = arith.constant dense<0.000000e+00> : vector<1x64xf32>
    %117 = tpu.matmul %116, %110, %cst_80 {dimension_numbers = #tpu.dot_dimension_numbers<[1], [0], [0], [1], [0, 0, 1, 1], [], []>} : vector<1x64xf32>, vector<64x64xf32>, vector<1x64xf32> -> vector<1x64xf32>
    %118 = arith.mulf %113, %113 : vector<1x64xf32>
    %119 = arith.subf %117, %118 : vector<1x64xf32>
    %c1380 = arith.constant 1380 : index
    %c0_81 = arith.constant 0 : index
    %120 = vector.load %arg2[%c1380, %c0_81] : memref<1386x64xf32, #tpu.memory_space<vmem>>, vector<1x64xf32>
    %cst_82 = arith.constant 9.99999974E-6 : f32
    %121 = vector.broadcast %cst_82 : f32 to vector<1x64xf32>
    %122 = arith.addf %119, %121 : vector<1x64xf32>
    %123 = math.rsqrt %122 : vector<1x64xf32>
    %124 = arith.mulf %120, %123 : vector<1x64xf32>
    %125 = vector.broadcast %113 : vector<1x64xf32> to vector<16x64xf32>
    %126 = arith.subf %109, %125 : vector<16x64xf32>
    %127 = vector.broadcast %124 : vector<1x64xf32> to vector<16x64xf32>
    %128 = arith.mulf %126, %127 : vector<16x64xf32>
    %c1381 = arith.constant 1381 : index
    %c0_83 = arith.constant 0 : index
    %129 = vector.load %arg2[%c1381, %c0_83] : memref<1386x64xf32, #tpu.memory_space<vmem>>, vector<1x64xf32>
    %130 = vector.broadcast %129 : vector<1x64xf32> to vector<16x64xf32>
    %131 = arith.addf %128, %130 : vector<16x64xf32>
    %cst_84 = arith.constant 0.000000e+00 : f32
    %132 = vector.broadcast %cst_84 : f32 to vector<16x64xf32>
    %133 = arith.maximumf %131, %132 : vector<16x64xf32>
    %134 = vector.shape_cast %133 : vector<16x64xf32> to vector<2x4x2x64xf32>
    %c0_85 = arith.constant 0 : index
    %c0_86 = arith.constant 0 : index
    %c0_87 = arith.constant 0 : index
    %135 = vector.load %arg6[%c0_85, %c0_86, %c0_87] : memref<2x6x64xf32, #tpu.memory_space<vmem>>, vector<2x1x64xf32>
    tpu.vector_store %arg6[%c0_85, %c0_86, %c0_87], %0 {strides = array<i32>} : memref<2x6x64xf32, #tpu.memory_space<vmem>>, vector<2x1x64xf32>,
    %c0_88 = arith.constant 0 : index
    %c5 = arith.constant 5 : index
    %c0_89 = arith.constant 0 : index
    %136 = vector.load %arg6[%c0_88, %c5, %c0_89] : memref<2x6x64xf32, #tpu.memory_space<vmem>>, vector<2x1x64xf32>
    tpu.vector_store %arg6[%c0_88, %c5, %c0_89], %0 {strides = array<i32>} : memref<2x6x64xf32, #tpu.memory_space<vmem>>, vector<2x1x64xf32>,
    %137 = vector.extract_strided_slice %134 {offsets = [0, 0, 0, 0], sizes = [2, 4, 1, 64], strides = [1, 1, 1, 1]} : vector<2x4x2x64xf32> to vector<2x4x1x64xf32>
    %138 = vector.shape_cast %137 : vector<2x4x1x64xf32> to vector<2x4x64xf32>
    %c0_90 = arith.constant 0 : index
    %c1_91 = arith.constant 1 : index
    %c0_92 = arith.constant 0 : index
    %139 = vector.load %arg6[%c0_90, %c1_91, %c0_92] : memref<2x6x64xf32, #tpu.memory_space<vmem>>, vector<2x4x64xf32>
    tpu.vector_store %arg6[%c0_90, %c1_91, %c0_92], %138 {strides = array<i32>} : memref<2x6x64xf32, #tpu.memory_space<vmem>>, vector<2x4x64xf32>,
    %c0_93 = arith.constant 0 : index
    %c0_94 = arith.constant 0 : index
    %c0_95 = arith.constant 0 : index
    %140 = vector.load %arg7[%c0_93, %c0_94, %c0_95] : memref<2x6x64xf32, #tpu.memory_space<vmem>>, vector<2x1x64xf32>
    tpu.vector_store %arg7[%c0_93, %c0_94, %c0_95], %0 {strides = array<i32>} : memref<2x6x64xf32, #tpu.memory_space<vmem>>, vector<2x1x64xf32>,
    %c0_96 = arith.constant 0 : index
    %c5_97 = arith.constant 5 : index
    %c0_98 = arith.constant 0 : index
    %141 = vector.load %arg7[%c0_96, %c5_97, %c0_98] : memref<2x6x64xf32, #tpu.memory_space<vmem>>, vector<2x1x64xf32>
    tpu.vector_store %arg7[%c0_96, %c5_97, %c0_98], %0 {strides = array<i32>} : memref<2x6x64xf32, #tpu.memory_space<vmem>>, vector<2x1x64xf32>,
    %142 = vector.extract_strided_slice %134 {offsets = [0, 0, 1, 0], sizes = [2, 4, 1, 64], strides = [1, 1, 1, 1]} : vector<2x4x2x64xf32> to vector<2x4x1x64xf32>
    %143 = vector.shape_cast %142 : vector<2x4x1x64xf32> to vector<2x4x64xf32>
    %c0_99 = arith.constant 0 : index
    %c1_100 = arith.constant 1 : index
    %c0_101 = arith.constant 0 : index
    %144 = vector.load %arg7[%c0_99, %c1_100, %c0_101] : memref<2x6x64xf32, #tpu.memory_space<vmem>>, vector<2x4x64xf32>
    tpu.vector_store %arg7[%c0_99, %c1_100, %c0_101], %143 {strides = array<i32>} : memref<2x6x64xf32, #tpu.memory_space<vmem>>, vector<2x4x64xf32>,
    %c0_102 = arith.constant 0 : index
    %c0_103 = arith.constant 0 : index
    %c0_104 = arith.constant 0 : index
    %145 = vector.load %arg6[%c0_102, %c0_103, %c0_104] : memref<2x6x64xf32, #tpu.memory_space<vmem>>, vector<2x4x64xf32>
    %c0_105 = arith.constant 0 : index
    %c0_106 = arith.constant 0 : index
    %c0_107 = arith.constant 0 : index
    %146 = vector.load %arg7[%c0_105, %c0_106, %c0_107] : memref<2x6x64xf32, #tpu.memory_space<vmem>>, vector<2x4x64xf32>
    %c0_108 = arith.constant 0 : index
    %c1_109 = arith.constant 1 : index
    %c0_110 = arith.constant 0 : index
    %147 = vector.load %arg6[%c0_108, %c1_109, %c0_110] : memref<2x6x64xf32, #tpu.memory_space<vmem>>, vector<2x4x64xf32>
    %c0_111 = arith.constant 0 : index
    %c1_112 = arith.constant 1 : index
    %c0_113 = arith.constant 0 : index
    %148 = vector.load %arg7[%c0_111, %c1_112, %c0_113] : memref<2x6x64xf32, #tpu.memory_space<vmem>>, vector<2x4x64xf32>
    %c0_114 = arith.constant 0 : index
    %c2_115 = arith.constant 2 : index
    %c0_116 = arith.constant 0 : index
    %149 = vector.load %arg6[%c0_114, %c2_115, %c0_116] : memref<2x6x64xf32, #tpu.memory_space<vmem>>, vector<2x4x64xf32>
    %150 = vector.shape_cast %145 : vector<2x4x64xf32> to vector<8x64xf32>
    %151 = arith.truncf %150 : vector<8x64xf32> to vector<8x64xbf16>
    %c800 = arith.constant 800 : index
    %c0_117 = arith.constant 0 : index
    %152 = vector.load %arg2[%c800, %c0_117] : memref<1386x64xf32, #tpu.memory_space<vmem>>, vector<64x64xf32>
    %153 = arith.truncf %152 : vector<64x64xf32> to vector<64x64xbf16>
    %cst_118 = arith.constant dense<0.000000e+00> : vector<8x64xf32>
    %154 = tpu.matmul %151, %153, %cst_118 {dimension_numbers = #tpu.dot_dimension_numbers<[1], [0], [0], [1], [0, 0, 1, 1], [], []>} : vector<8x64xbf16>, vector<64x64xbf16>, vector<8x64xf32> -> vector<8x64xf32>
    %155 = vector.shape_cast %146 : vector<2x4x64xf32> to vector<8x64xf32>
    %156 = arith.truncf %155 : vector<8x64xf32> to vector<8x64xbf16>
    %c864 = arith.constant 864 : index
    %c0_119 = arith.constant 0 : index
    %157 = vector.load %arg2[%c864, %c0_119] : memref<1386x64xf32, #tpu.memory_space<vmem>>, vector<64x64xf32>
    %158 = arith.truncf %157 : vector<64x64xf32> to vector<64x64xbf16>
    %cst_120 = arith.constant dense<0.000000e+00> : vector<8x64xf32>
    %159 = tpu.matmul %156, %158, %cst_120 {dimension_numbers = #tpu.dot_dimension_numbers<[1], [0], [0], [1], [0, 0, 1, 1], [], []>} : vector<8x64xbf16>, vector<64x64xbf16>, vector<8x64xf32> -> vector<8x64xf32>
    %160 = arith.addf %154, %159 : vector<8x64xf32>
    %161 = vector.shape_cast %147 : vector<2x4x64xf32> to vector<8x64xf32>
    %162 = arith.truncf %161 : vector<8x64xf32> to vector<8x64xbf16>
    %c928 = arith.constant 928 : index
    %c0_121 = arith.constant 0 : index
    %163 = vector.load %arg2[%c928, %c0_121] : memref<1386x64xf32, #tpu.memory_space<vmem>>, vector<64x64xf32>
    %164 = arith.truncf %163 : vector<64x64xf32> to vector<64x64xbf16>
    %cst_122 = arith.constant dense<0.000000e+00> : vector<8x64xf32>
    %165 = tpu.matmul %162, %164, %cst_122 {dimension_numbers = #tpu.dot_dimension_numbers<[1], [0], [0], [1], [0, 0, 1, 1], [], []>} : vector<8x64xbf16>, vector<64x64xbf16>, vector<8x64xf32> -> vector<8x64xf32>
    %166 = arith.addf %160, %165 : vector<8x64xf32>
    %167 = vector.shape_cast %148 : vector<2x4x64xf32> to vector<8x64xf32>
    %168 = arith.truncf %167 : vector<8x64xf32> to vector<8x64xbf16>
    %c992 = arith.constant 992 : index
    %c0_123 = arith.constant 0 : index
    %169 = vector.load %arg2[%c992, %c0_123] : memref<1386x64xf32, #tpu.memory_space<vmem>>, vector<64x64xf32>
    %170 = arith.truncf %169 : vector<64x64xf32> to vector<64x64xbf16>
    %cst_124 = arith.constant dense<0.000000e+00> : vector<8x64xf32>
    %171 = tpu.matmul %168, %170, %cst_124 {dimension_numbers = #tpu.dot_dimension_numbers<[1], [0], [0], [1], [0, 0, 1, 1], [], []>} : vector<8x64xbf16>, vector<64x64xbf16>, vector<8x64xf32> -> vector<8x64xf32>
    %172 = arith.addf %166, %171 : vector<8x64xf32>
    %173 = vector.shape_cast %149 : vector<2x4x64xf32> to vector<8x64xf32>
    %174 = arith.truncf %173 : vector<8x64xf32> to vector<8x64xbf16>
    %c1056 = arith.constant 1056 : index
    %c0_125 = arith.constant 0 : index
    %175 = vector.load %arg2[%c1056, %c0_125] : memref<1386x64xf32, #tpu.memory_space<vmem>>, vector<64x64xf32>
    %176 = arith.truncf %175 : vector<64x64xf32> to vector<64x64xbf16>
    %cst_126 = arith.constant dense<0.000000e+00> : vector<8x64xf32>
    %177 = tpu.matmul %174, %176, %cst_126 {dimension_numbers = #tpu.dot_dimension_numbers<[1], [0], [0], [1], [0, 0, 1, 1], [], []>} : vector<8x64xbf16>, vector<64x64xbf16>, vector<8x64xf32> -> vector<8x64xf32>
    %178 = arith.addf %172, %177 : vector<8x64xf32>
    %c1382 = arith.constant 1382 : index
    %c0_127 = arith.constant 0 : index
    %179 = vector.load %arg2[%c1382, %c0_127] : memref<1386x64xf32, #tpu.memory_space<vmem>>, vector<1x64xf32>
    %180 = vector.broadcast %179 : vector<1x64xf32> to vector<8x64xf32>
    %181 = arith.addf %178, %180 : vector<8x64xf32>
    %c1248 = arith.constant 1248 : index
    %c0_128 = arith.constant 0 : index
    %182 = vector.load %arg2[%c1248, %c0_128] : memref<1386x64xf32, #tpu.memory_space<vmem>>, vector<64x64xf32>
    %cst_129 = arith.constant dense<0.000000e+00> : vector<64xf32>
    %183 = vector.multi_reduction <add>, %181, %cst_129 [0] : vector<8x64xf32> to vector<64xf32>
    %184 = vector.shape_cast %183 : vector<64xf32> to vector<1x64xf32>
    %cst_130 = arith.constant dense<0.000000e+00> : vector<1x64xf32>
    %185 = tpu.matmul %184, %182, %cst_130 {dimension_numbers = #tpu.dot_dimension_numbers<[1], [0], [0], [1], [0, 0, 1, 1], [], []>} : vector<1x64xf32>, vector<64x64xf32>, vector<1x64xf32> -> vector<1x64xf32>
    %186 = arith.mulf %181, %181 : vector<8x64xf32>
    %cst_131 = arith.constant dense<0.000000e+00> : vector<64xf32>
    %187 = vector.multi_reduction <add>, %186, %cst_131 [0] : vector<8x64xf32> to vector<64xf32>
    %188 = vector.shape_cast %187 : vector<64xf32> to vector<1x64xf32>
    %cst_132 = arith.constant dense<0.000000e+00> : vector<1x64xf32>
    %189 = tpu.matmul %188, %182, %cst_132 {dimension_numbers = #tpu.dot_dimension_numbers<[1], [0], [0], [1], [0, 0, 1, 1], [], []>} : vector<1x64xf32>, vector<64x64xf32>, vector<1x64xf32> -> vector<1x64xf32>
    %190 = arith.mulf %185, %185 : vector<1x64xf32>
    %191 = arith.subf %189, %190 : vector<1x64xf32>
    %c1383 = arith.constant 1383 : index
    %c0_133 = arith.constant 0 : index
    %192 = vector.load %arg2[%c1383, %c0_133] : memref<1386x64xf32, #tpu.memory_space<vmem>>, vector<1x64xf32>
    %cst_134 = arith.constant 9.99999974E-6 : f32
    %193 = vector.broadcast %cst_134 : f32 to vector<1x64xf32>
    %194 = arith.addf %191, %193 : vector<1x64xf32>
    %195 = math.rsqrt %194 : vector<1x64xf32>
    %196 = arith.mulf %192, %195 : vector<1x64xf32>
    %197 = vector.broadcast %185 : vector<1x64xf32> to vector<8x64xf32>
    %198 = arith.subf %181, %197 : vector<8x64xf32>
    %199 = vector.broadcast %196 : vector<1x64xf32> to vector<8x64xf32>
    %200 = arith.mulf %198, %199 : vector<8x64xf32>
    %c1384 = arith.constant 1384 : index
    %c0_135 = arith.constant 0 : index
    %201 = vector.load %arg2[%c1384, %c0_135] : memref<1386x64xf32, #tpu.memory_space<vmem>>, vector<1x64xf32>
    %202 = vector.broadcast %201 : vector<1x64xf32> to vector<8x64xf32>
    %203 = arith.addf %200, %202 : vector<8x64xf32>
    %cst_136 = arith.constant 0.000000e+00 : f32
    %204 = vector.broadcast %cst_136 : f32 to vector<8x64xf32>
    %205 = arith.maximumf %203, %204 : vector<8x64xf32>
    %206 = vector.shape_cast %205 : vector<8x64xf32> to vector<2x4x64xf32>
    %207 = vector.extract_strided_slice %206 {offsets = [0, 0, 0], sizes = [2, 1, 64], strides = [1, 1, 1]} : vector<2x4x64xf32> to vector<2x1x64xf32>
    %208 = vector.shape_cast %207 : vector<2x1x64xf32> to vector<2x64xf32>
    %209 = vector.extract_strided_slice %206 {offsets = [0, 1, 0], sizes = [2, 1, 64], strides = [1, 1, 1]} : vector<2x4x64xf32> to vector<2x1x64xf32>
    %210 = vector.shape_cast %209 : vector<2x1x64xf32> to vector<2x64xf32>
    %211 = arith.addf %208, %210 : vector<2x64xf32>
    %212 = vector.extract_strided_slice %206 {offsets = [0, 2, 0], sizes = [2, 1, 64], strides = [1, 1, 1]} : vector<2x4x64xf32> to vector<2x1x64xf32>
    %213 = vector.shape_cast %212 : vector<2x1x64xf32> to vector<2x64xf32>
    %214 = arith.addf %211, %213 : vector<2x64xf32>
    %215 = vector.extract_strided_slice %206 {offsets = [0, 3, 0], sizes = [2, 1, 64], strides = [1, 1, 1]} : vector<2x4x64xf32> to vector<2x1x64xf32>
    %216 = vector.shape_cast %215 : vector<2x1x64xf32> to vector<2x64xf32>
    %217 = arith.addf %214, %216 : vector<2x64xf32>
    %c1312 = arith.constant 1312 : index
    %c0_137 = arith.constant 0 : index
    %218 = vector.load %arg2[%c1312, %c0_137] : memref<1386x64xf32, #tpu.memory_space<vmem>>, vector<64x64xf32>
    %cst_138 = arith.constant dense<0.000000e+00> : vector<2x64xf32>
    %219 = tpu.matmul %217, %218, %cst_138 {dimension_numbers = #tpu.dot_dimension_numbers<[1], [0], [0], [1], [0, 0, 1, 1], [], []>} : vector<2x64xf32>, vector<64x64xf32>, vector<2x64xf32> -> vector<2x64xf32>
    %c1385 = arith.constant 1385 : index
    %c0_139 = arith.constant 0 : index
    %220 = vector.load %arg2[%c1385, %c0_139] : memref<1386x64xf32, #tpu.memory_space<vmem>>, vector<1x64xf32>
    %221 = vector.broadcast %220 : vector<1x64xf32> to vector<2x64xf32>
    %222 = arith.addf %219, %221 : vector<2x64xf32>
    %223 = tpu.iota {dimensions = array<i32: 1>} : vector<2x64xi32>
    %c8_i32 = arith.constant 8 : i32
    %224 = vector.broadcast %c8_i32 : i32 to vector<2x64xi32>
    %225 = arith.cmpi slt, %223, %224 : vector<2x64xi32>
    %226 = math.tanh %222 : vector<2x64xf32>
    %227 = arith.select %225, %226, %222 : vector<2x64xi1>, vector<2x64xf32>
    %c0_140 = arith.constant 0 : index
    %c0_141 = arith.constant 0 : index
    %228 = vector.load %arg3[%c0_140, %c0_141] : memref<2x64xf32, #tpu.memory_space<vmem>>, vector<2x64xf32>
    tpu.vector_store %arg3[%c0_140, %c0_141], %227 {strides = array<i32>} : memref<2x64xf32, #tpu.memory_space<vmem>>, vector<2x64xf32>,
    return
  }
}

</mosaic_0001>

<llo_original>
// kernel: latent_state_encoder_forward.1
$region0: #{latent_state_encoder_forward.1}
  #allocation0 [shape = 'u32[]', space=smem, size = 0x4, offset = 0x4, fixed_abs, tag = 'smem constant byte address 0x4 - core index']
  #allocation1 [shape = 'u32[144,128]{1,0:T(1,128)}', space=vmem, size = 0x12000, scoped, tag = 'internal scratch']
  #allocation2 [shape = 'f32[2,10,64]{2,1,0:T(8,128)}', space=vmem, size = 0x4000, scoped, tag = 'scratch operand']
  #allocation3 [shape = 'f32[2,10,64]{2,1,0:T(8,128)}', space=vmem, size = 0x4000, scoped, tag = 'scratch operand']
  #allocation4 [shape = 'f32[2,6,64]{2,1,0:T(8,128)}', space=vmem, size = 0x2000, scoped, tag = 'scratch operand']
  #allocation5 [shape = 'f32[2,6,64]{2,1,0:T(8,128)}', space=vmem, size = 0x2000, scoped, tag = 'scratch operand']
  %s0 = inlined_call_operand.vmem [shape: f32[2,18,96], index: 0, kind: input, shape index: {}]
  %s1 = inlined_call_operand.vmem [shape: f32[2,18,96], index: 1, kind: input, shape index: {}]
  %s2 = inlined_call_operand.vmem [shape: f32[1386,64], index: 2, kind: input, shape index: {}]
  %s3 = inlined_call_operand.vmem [shape: f32[2,64], index: 3, kind: output, shape index: {}]
  %s4 = sld [smem:[#allocation0]]
  $region22: #{latent_state_encoder_forward.1} parent=0
    _
  %s6 = ssub.s32 1, %s4
  %s7 = scalar_select 0, %s6, %s4
  // Predicated region
  $region2: #{latent_state_encoder_forward.1} parent=0 // pred_check
    _
  $region3: #{latent_state_encoder_forward.1} parent=0 // pred_check_branch
    %9 = sbr.rel (0) target = $region5
  $region4: #{latent_state_encoder_forward.1} parent=0 // pred_region
    _
  $region5: #{latent_state_encoder_forward.1} parent=0 // pred_fallthru
    _
  // Predicated region
  $region6: #{latent_state_encoder_forward.1} parent=0 // pred_check
    _
  $region7: #{latent_state_encoder_forward.1} parent=0 // pred_check_branch
    %11 = sbr.rel (0) target = $region9
  $region8: #{latent_state_encoder_forward.1} parent=0 // pred_region
    _
  $region9: #{latent_state_encoder_forward.1} parent=0 // pred_fallthru
    _
  // Predicated region
  $region10: #{latent_state_encoder_forward.1} parent=0 // pred_check
    _
  $region11: #{latent_state_encoder_forward.1} parent=0 // pred_check_branch
    %13 = sbr.rel (0) target = $region13
  $region12: #{latent_state_encoder_forward.1} parent=0 // pred_region
    _
  $region13: #{latent_state_encoder_forward.1} parent=0 // pred_fallthru
    _
  %v15 = vld [vmem:[%s0] sm:$0xff]
  %v16 = vld [vmem:[%s0 + $0x8] sm:$0xff]
  %v17 = vld [vmem:[%s0 + $0x18] sm:$0xff]
  %v18 = vld [vmem:[%s0 + $0x20] sm:$0xff]
  %v19 = vld [vmem:[%s1] sm:$0xff]
  %v20 = vld [vmem:[%s1 + $0x8] sm:$0xff]
  %v21 = vld [vmem:[%s1 + $0x18] sm:$0xff]
  %v22 = vld [vmem:[%s1 + $0x20] sm:$0xff]
  %v23 = vld [vmem:[%s0 + $0x1] sm:$0xff]
  %v24 = vld [vmem:[%s0 + $0x9] sm:$0xff]
  %v25 = vld [vmem:[%s0 + $0x19] sm:$0xff]
  %v26 = vld [vmem:[%s0 + $0x21] sm:$0xff]
  %v27 = vld [vmem:[%s1 + $0x1] sm:$0xff]
  %v28 = vld [vmem:[%s1 + $0x9] sm:$0xff]
  %v29 = vld [vmem:[%s1 + $0x19] sm:$0xff]
  %v30 = vld [vmem:[%s1 + $0x21] sm:$0xff]
  %v31 = vld [vmem:[%s0 + $0x2] sm:$0xff]
  %v32 = vld [vmem:[%s0 + $0xa] sm:$0xff]
  %v33 = vld [vmem:[%s0 + $0x1a] sm:$0xff]
  %v34 = vld [vmem:[%s0 + $0x22] sm:$0xff]
  %v35 = vpack.c.bf16 %v16, %v15
  %v36 = vpack.c.bf16 %v18, %v17
  %v37 = vld [vmem:[%s2] sm:$0xff]
  %v38 = vld [vmem:[%s2 + $0x8] sm:$0xff]
  %v39 = vld [vmem:[%s2 + $0x10] sm:$0xff]
  %v40 = vld [vmem:[%s2 + $0x18] sm:$0xff]
  %v41 = vld [vmem:[%s2 + $0x20] sm:$0xff]
  %v42 = vld [vmem:[%s2 + $0x28] sm:$0xff]
  %v43 = vld [vmem:[%s2 + $0x30] sm:$0xff]
  %v44 = vld [vmem:[%s2 + $0x38] sm:$0xff]
  %v45 = vld [vmem:[%s2 + $0x40] sm:$0xff]
  %v46 = vld [vmem:[%s2 + $0x48] sm:$0xff]
  %v47 = vld [vmem:[%s2 + $0x50] sm:$0xff]
  %v48 = vld [vmem:[%s2 + $0x58] sm:$0xff]
  %v49 = vpack.c.bf16 %v38, %v37
  %v50 = vpack.c.bf16 %v40, %v39
  %v51 = vpack.c.bf16 %v42, %v41
  %v52 = vpack.c.bf16 %v44, %v43
  %v53 = vpack.c.bf16 %v46, %v45
  %v54 = vpack.c.bf16 %v48, %v47
  %v55 = vpack.c.bf16 %v20, %v19
  %v56 = vpack.c.bf16 %v22, %v21
  %v57 = vld [vmem:[%s2 + $0x60] sm:$0xff]
  %v58 = vld [vmem:[%s2 + $0x68] sm:$0xff]
  %v59 = vld [vmem:[%s2 + $0x70] sm:$0xff]
  %v60 = vld [vmem:[%s2 + $0x78] sm:$0xff]
  %v61 = vld [vmem:[%s2 + $0x80] sm:$0xff]
  %v62 = vld [vmem:[%s2 + $0x88] sm:$0xff]
  %v63 = vld [vmem:[%s2 + $0x90] sm:$0xff]
  %v64 = vld [vmem:[%s2 + $0x98] sm:$0xff]
  %v65 = vld [vmem:[%s2 + $0xa0] sm:$0xff]
  %v66 = vld [vmem:[%s2 + $0xa8] sm:$0xff]
  %v67 = vld [vmem:[%s2 + $0xb0] sm:$0xff]
  %v68 = vld [vmem:[%s2 + $0xb8] sm:$0xff]
  %v69 = vpack.c.bf16 %v58, %v57
  %v70 = vpack.c.bf16 %v60, %v59
  %v71 = vpack.c.bf16 %v62, %v61
  %v72 = vpack.c.bf16 %v64, %v63
  %v73 = vpack.c.bf16 %v66, %v65
  %v74 = vpack.c.bf16 %v68, %v67
  %vm75 = vcmask 785408
  %v77 = vsel %vm75, %v55, 0
  %v80 = vsel %vm75, %v56, 0
  %82 = vmatprep.subr.bf16.mxu0 0
  %83 = vmatpush1.bf16.msra.mxu0 %v69
  %84 = vmatprep.subr.bf16.mxu0 0
  %85 = vmatpush1.bf16.msra.mxu0 %v70
  %86 = vmatprep.subr.bf16.mxu0 0
  %87 = vmatpush1.bf16.msra.mxu0 %v71
  %88 = vmatprep.subr.bf16.mxu0 0
  %89 = vmatpush1.bf16.msra.mxu0 %v72
  %90 = vmatprep.subr.bf16.mxu0 0
  %91 = vmatpush1.bf16.msra.mxu0 %v73
  %92 = vmatprep.subr.bf16.mxu0 0
  %93 = vmatpush1.bf16.msra.mxu0 %v74
  %94 = vmatprep.subr.bf16.mxu0 0
  %95 = vmatpush1.bf16.msra.mxu0 0
  %96 = vmatprep.subr.bf16.mxu0 0
  %97 = vmatpush1.bf16.msra.mxu0 0
  %98 = vmatprep.subr.bf16.mxu0 0
  %99 = vmatpush1.bf16.msra.mxu0 0
  %100 = vmatprep.subr.bf16.mxu0 0
  %101 = vmatpush1.bf16.msra.mxu0 0
  %102 = vmatprep.subr.bf16.mxu0 0
  %103 = vmatpush1.bf16.msra.mxu0 0
  %104 = vmatprep.subr.bf16.mxu0 0
  %105 = vmatpush1.bf16.msra.mxu0 0
  %106 = vmatprep.subr.bf16.mxu0 0
  %107 = vmatpush1.bf16.msra.mxu0 0
  %108 = vmatprep.subr.bf16.mxu0 0
  %109 = vmatpush1.bf16.msra.mxu0 0
  %110 = vmatprep.subr.bf16.mxu0 0
  %111 = vmatpush1.bf16.msra.mxu0 0
  %112 = vmatprep.subr.bf16.mxu0 0
  %113 = vmatpush1.bf16.msra.mxu0 0
  %114 = vmatprep.mubr.bf16.mxu0 0
  %115 = vmatmul.mubr.bf16.gmra.mrb[0].mxu0 %v77
  %v116 = vpop.f32.mrb[0].mxu0
  %v117 = vadd.f32 0.0, %v116
  %v118 = vpop.f32.mrb[0].mxu0
  %v119 = vpop.f32.mrb[0].mxu0
  %v120 = vadd.f32 0.0, %v119
  %v121 = vpop.f32.mrb[0].mxu0
  %122 = vmatprep.mubr.bf16.mxu0 0
  %123 = vmatmul.mubr.bf16.gmra.mrb[0].mxu0 %v80
  %v124 = vpop.f32.mrb[0].mxu0
  %v125 = vadd.f32 0.0, %v124
  %v126 = vpop.f32.mrb[0].mxu0
  %v127 = vpop.f32.mrb[0].mxu0
  %v128 = vadd.f32 0.0, %v127
  %v129 = vpop.f32.mrb[0].mxu0
  %130 = vdwg.mxu0
  %v132 = vsel %vm75, %v35, 0
  %v135 = vsel %vm75, %v36, 0
  %137 = vmatprep.subr.bf16.mxu0 0
  %138 = vmatpush1.bf16.msra.mxu0 %v49
  %139 = vmatprep.subr.bf16.mxu0 0
  %140 = vmatpush1.bf16.msra.mxu0 %v50
  %141 = vmatprep.subr.bf16.mxu0 0
  %142 = vmatpush1.bf16.msra.mxu0 %v51
  %143 = vmatprep.subr.bf16.mxu0 0
  %144 = vmatpush1.bf16.msra.mxu0 %v52
  %145 = vmatprep.subr.bf16.mxu0 0
  %146 = vmatpush1.bf16.msra.mxu0 %v53
  %147 = vmatprep.subr.bf16.mxu0 0
  %148 = vmatpush1.bf16.msra.mxu0 %v54
  %149 = vmatprep.subr.bf16.mxu0 0
  %150 = vmatpush1.bf16.msra.mxu0 0
  %151 = vmatprep.subr.bf16.mxu0 0
  %152 = vmatpush1.bf16.msra.mxu0 0
  %153 = vmatprep.subr.bf16.mxu0 0
  %154 = vmatpush1.bf16.msra.mxu0 0
  %155 = vmatprep.subr.bf16.mxu0 0
  %156 = vmatpush1.bf16.msra.mxu0 0
  %157 = vmatprep.subr.bf16.mxu0 0
  %158 = vmatpush1.bf16.msra.mxu0 0
  %159 = vmatprep.subr.bf16.mxu0 0
  %160 = vmatpush1.bf16.msra.mxu0 0
  %161 = vmatprep.subr.bf16.mxu0 0
  %162 = vmatpush1.bf16.msra.mxu0 0
  %163 = vmatprep.subr.bf16.mxu0 0
  %164 = vmatpush1.bf16.msra.mxu0 0
  %165 = vmatprep.subr.bf16.mxu0 0
  %166 = vmatpush1.bf16.msra.mxu0 0
  %167 = vmatprep.subr.bf16.mxu0 0
  %168 = vmatpush1.bf16.msra.mxu0 0
  %169 = vmatprep.mubr.bf16.mxu0 0
  %170 = vmatmul.mubr.bf16.gmra.mrb[0].mxu0 %v132
  %v171 = vpop.f32.mrb[0].mxu0
  %v172 = vadd.f32 %v117, %v171
  %v173 = vpop.f32.mrb[0].mxu0
  %v174 = vpop.f32.mrb[0].mxu0
  %v175 = vadd.f32 %v120, %v174
  %v176 = vpop.f32.mrb[0].mxu0
  %177 = vmatprep.mubr.bf16.mxu0 0
  %178 = vmatmul.mubr.bf16.gmra.mrb[0].mxu0 %v135
  %v179 = vpop.f32.mrb[0].mxu0
  %v180 = vadd.f32 %v125, %v179
  %v181 = vpop.f32.mrb[0].mxu0
  %v182 = vpop.f32.mrb[0].mxu0
  %v183 = vadd.f32 %v128, %v182
  %v184 = vpop.f32.mrb[0].mxu0
  %185 = vdwg.mxu0
  %v186 = vpack.c.bf16 %v24, %v23
  %v187 = vpack.c.bf16 %v26, %v25
  %v188 = vld [vmem:[%s2 + $0xc0] sm:$0xff]
  %v189 = vld [vmem:[%s2 + $0xc8] sm:$0xff]
  %v190 = vld [vmem:[%s2 + $0xd0] sm:$0xff]
  %v191 = vld [vmem:[%s2 + $0xd8] sm:$0xff]
  %v192 = vld [vmem:[%s2 + $0xe0] sm:$0xff]
  %v193 = vld [vmem:[%s2 + $0xe8] sm:$0xff]
  %v194 = vld [vmem:[%s2 + $0xf0] sm:$0xff]
  %v195 = vld [vmem:[%s2 + $0xf8] sm:$0xff]
  %v196 = vld [vmem:[%s2 + $0x100] sm:$0xff]
  %v197 = vld [vmem:[%s2 + $0x108] sm:$0xff]
  %v198 = vld [vmem:[%s2 + $0x110] sm:$0xff]
  %v199 = vld [vmem:[%s2 + $0x118] sm:$0xff]
  %v200 = vpack.c.bf16 %v189, %v188
  %v201 = vpack.c.bf16 %v191, %v190
  %v202 = vpack.c.bf16 %v193, %v192
  %v203 = vpack.c.bf16 %v195, %v194
  %v204 = vpack.c.bf16 %v197, %v196
  %v205 = vpack.c.bf16 %v199, %v198
  %v207 = vsel %vm75, %v186, 0
  %v210 = vsel %vm75, %v187, 0
  %212 = vmatprep.subr.bf16.mxu0 0
  %213 = vmatpush1.bf16.msra.mxu0 %v200
  %214 = vmatprep.subr.bf16.mxu0 0
  %215 = vmatpush1.bf16.msra.mxu0 %v201
  %216 = vmatprep.subr.bf16.mxu0 0
  %217 = vmatpush1.bf16.msra.mxu0 %v202
  %218 = vmatprep.subr.bf16.mxu0 0
  %219 = vmatpush1.bf16.msra.mxu0 %v203
  %220 = vmatprep.subr.bf16.mxu0 0
  %221 = vmatpush1.bf16.msra.mxu0 %v204
  %222 = vmatprep.subr.bf16.mxu0 0
  %223 = vmatpush1.bf16.msra.mxu0 %v205
  %224 = vmatprep.subr.bf16.mxu0 0
  %225 = vmatpush1.bf16.msra.mxu0 0
  %226 = vmatprep.subr.bf16.mxu0 0
  %227 = vmatpush1.bf16.msra.mxu0 0
  %228 = vmatprep.subr.bf16.mxu0 0
  %229 = vmatpush1.bf16.msra.mxu0 0
  %230 = vmatprep.subr.bf16.mxu0 0
  %231 = vmatpush1.bf16.msra.mxu0 0
  %232 = vmatprep.subr.bf16.mxu0 0
  %233 = vmatpush1.bf16.msra.mxu0 0
  %234 = vmatprep.subr.bf16.mxu0 0
  %235 = vmatpush1.bf16.msra.mxu0 0
  %236 = vmatprep.subr.bf16.mxu0 0
  %237 = vmatpush1.bf16.msra.mxu0 0
  %238 = vmatprep.subr.bf16.mxu0 0
  %239 = vmatpush1.bf16.msra.mxu0 0
  %240 = vmatprep.subr.bf16.mxu0 0
  %241 = vmatpush1.bf16.msra.mxu0 0
  %242 = vmatprep.subr.bf16.mxu0 0
  %243 = vmatpush1.bf16.msra.mxu0 0
  %244 = vmatprep.mubr.bf16.mxu0 0
  %245 = vmatmul.mubr.bf16.gmra.mrb[0].mxu0 %v207
  %v246 = vpop.f32.mrb[0].mxu0
  %v247 = vadd.f32 0.0, %v246
  %v248 = vpop.f32.mrb[0].mxu0
  %v249 = vpop.f32.mrb[0].mxu0
  %v250 = vadd.f32 0.0, %v249
  %v251 = vpop.f32.mrb[0].mxu0
  %252 = vmatprep.mubr.bf16.mxu0 0
  %253 = vmatmul.mubr.bf16.gmra.mrb[0].mxu0 %v210
  %v254 = vpop.f32.mrb[0].mxu0
  %v255 = vadd.f32 0.0, %v254
  %v256 = vpop.f32.mrb[0].mxu0
  %v257 = vpop.f32.mrb[0].mxu0
  %v258 = vadd.f32 0.0, %v257
  %v259 = vpop.f32.mrb[0].mxu0
  %260 = vdwg.mxu0
  %v261 = vadd.f32 %v172, %v247
  %v262 = vadd.f32 %v175, %v250
  %v263 = vadd.f32 %v180, %v255
  %v264 = vadd.f32 %v183, %v258
  %v265 = vpack.c.bf16 %v28, %v27
  %v266 = vpack.c.bf16 %v30, %v29
  %v267 = vld [vmem:[%s2 + $0x120] sm:$0xff]
  %v268 = vld [vmem:[%s2 + $0x128] sm:$0xff]
  %v269 = vld [vmem:[%s2 + $0x130] sm:$0xff]
  %v270 = vld [vmem:[%s2 + $0x138] sm:$0xff]
  %v271 = vld [vmem:[%s2 + $0x140] sm:$0xff]
  %v272 = vld [vmem:[%s2 + $0x148] sm:$0xff]
  %v273 = vld [vmem:[%s2 + $0x150] sm:$0xff]
  %v274 = vld [vmem:[%s2 + $0x158] sm:$0xff]
  %v275 = vld [vmem:[%s2 + $0x160] sm:$0xff]
  %v276 = vld [vmem:[%s2 + $0x168] sm:$0xff]
  %v277 = vld [vmem:[%s2 + $0x170] sm:$0xff]
  %v278 = vld [vmem:[%s2 + $0x178] sm:$0xff]
  %v279 = vpack.c.bf16 %v268, %v267
  %v280 = vpack.c.bf16 %v270, %v269
  %v281 = vpack.c.bf16 %v272, %v271
  %v282 = vpack.c.bf16 %v274, %v273
  %v283 = vpack.c.bf16 %v276, %v275
  %v284 = vpack.c.bf16 %v278, %v277
  %v286 = vsel %vm75, %v265, 0
  %v289 = vsel %vm75, %v266, 0
  %291 = vmatprep.subr.bf16.mxu0 0
  %292 = vmatpush1.bf16.msra.mxu0 %v279
  %293 = vmatprep.subr.bf16.mxu0 0
  %294 = vmatpush1.bf16.msra.mxu0 %v280
  %295 = vmatprep.subr.bf16.mxu0 0
  %296 = vmatpush1.bf16.msra.mxu0 %v281
  %297 = vmatprep.subr.bf16.mxu0 0
  %298 = vmatpush1.bf16.msra.mxu0 %v282
  %299 = vmatprep.subr.bf16.mxu0 0
  %300 = vmatpush1.bf16.msra.mxu0 %v283
  %301 = vmatprep.subr.bf16.mxu0 0
  %302 = vmatpush1.bf16.msra.mxu0 %v284
  %303 = vmatprep.subr.bf16.mxu0 0
  %304 = vmatpush1.bf16.msra.mxu0 0
  %305 = vmatprep.subr.bf16.mxu0 0
  %306 = vmatpush1.bf16.msra.mxu0 0
  %307 = vmatprep.subr.bf16.mxu0 0
  %308 = vmatpush1.bf16.msra.mxu0 0
  %309 = vmatprep.subr.bf16.mxu0 0
  %310 = vmatpush1.bf16.msra.mxu0 0
  %311 = vmatprep.subr.bf16.mxu0 0
  %312 = vmatpush1.bf16.msra.mxu0 0
  %313 = vmatprep.subr.bf16.mxu0 0
  %314 = vmatpush1.bf16.msra.mxu0 0
  %315 = vmatprep.subr.bf16.mxu0 0
  %316 = vmatpush1.bf16.msra.mxu0 0
  %317 = vmatprep.subr.bf16.mxu0 0
  %318 = vmatpush1.bf16.msra.mxu0 0
  %319 = vmatprep.subr.bf16.mxu0 0
  %320 = vmatpush1.bf16.msra.mxu0 0
  %321 = vmatprep.subr.bf16.mxu0 0
  %322 = vmatpush1.bf16.msra.mxu0 0
  %323 = vmatprep.mubr.bf16.mxu0 0
  %324 = vmatmul.mubr.bf16.gmra.mrb[0].mxu0 %v286
  %v325 = vpop.f32.mrb[0].mxu0
  %v326 = vadd.f32 0.0, %v325
  %v327 = vpop.f32.mrb[0].mxu0
  %v328 = vpop.f32.mrb[0].mxu0
  %v329 = vadd.f32 0.0, %v328
  %v330 = vpop.f32.mrb[0].mxu0
  %331 = vmatprep.mubr.bf16.mxu0 0
  %332 = vmatmul.mubr.bf16.gmra.mrb[0].mxu0 %v289
  %v333 = vpop.f32.mrb[0].mxu0
  %v334 = vadd.f32 0.0, %v333
  %v335 = vpop.f32.mrb[0].mxu0
  %v336 = vpop.f32.mrb[0].mxu0
  %v337 = vadd.f32 0.0, %v336
  %v338 = vpop.f32.mrb[0].mxu0
  %339 = vdwg.mxu0
  %v340 = vadd.f32 %v261, %v326
  %v341 = vadd.f32 %v262, %v329
  %v342 = vadd.f32 %v263, %v334
  %v343 = vadd.f32 %v264, %v337
  %v344 = vpack.c.bf16 %v32, %v31
  %v345 = vpack.c.bf16 %v34, %v33
  %v346 = vld [vmem:[%s2 + $0x180] sm:$0xff]
  %v347 = vld [vmem:[%s2 + $0x188] sm:$0xff]
  %v348 = vld [vmem:[%s2 + $0x190] sm:$0xff]
  %v349 = vld [vmem:[%s2 + $0x198] sm:$0xff]
  %v350 = vld [vmem:[%s2 + $0x1a0] sm:$0xff]
  %v351 = vld [vmem:[%s2 + $0x1a8] sm:$0xff]
  %v352 = vld [vmem:[%s2 + $0x1b0] sm:$0xff]
  %v353 = vld [vmem:[%s2 + $0x1b8] sm:$0xff]
  %v354 = vld [vmem:[%s2 + $0x1c0] sm:$0xff]
  %v355 = vld [vmem:[%s2 + $0x1c8] sm:$0xff]
  %v356 = vld [vmem:[%s2 + $0x1d0] sm:$0xff]
  %v357 = vld [vmem:[%s2 + $0x1d8] sm:$0xff]
  %v358 = vpack.c.bf16 %v347, %v346
  %v359 = vpack.c.bf16 %v349, %v348
  %v360 = vpack.c.bf16 %v351, %v350
  %v361 = vpack.c.bf16 %v353, %v352
  %v362 = vpack.c.bf16 %v355, %v354
  %v363 = vpack.c.bf16 %v357, %v356
  %v365 = vsel %vm75, %v344, 0
  %v368 = vsel %vm75, %v345, 0
  %370 = vmatprep.subr.bf16.mxu0 0
  %371 = vmatpush1.bf16.msra.mxu0 %v358
  %372 = vmatprep.subr.bf16.mxu0 0
  %373 = vmatpush1.bf16.msra.mxu0 %v359
  %374 = vmatprep.subr.bf16.mxu0 0
  %375 = vmatpush1.bf16.msra.mxu0 %v360
  %376 = vmatprep.subr.bf16.mxu0 0
  %377 = vmatpush1.bf16.msra.mxu0 %v361
  %378 = vmatprep.subr.bf16.mxu0 0
  %379 = vmatpush1.bf16.msra.mxu0 %v362
  %380 = vmatprep.subr.bf16.mxu0 0
  %381 = vmatpush1.bf16.msra.mxu0 %v363
  %382 = vmatprep.subr.bf16.mxu0 0
  %383 = vmatpush1.bf16.msra.mxu0 0
  %384 = vmatprep.subr.bf16.mxu0 0
  %385 = vmatpush1.bf16.msra.mxu0 0
  %386 = vmatprep.subr.bf16.mxu0 0
  %387 = vmatpush1.bf16.msra.mxu0 0
  %388 = vmatprep.subr.bf16.mxu0 0
  %389 = vmatpush1.bf16.msra.mxu0 0
  %390 = vmatprep.subr.bf16.mxu0 0
  %391 = vmatpush1.bf16.msra.mxu0 0
  %392 = vmatprep.subr.bf16.mxu0 0
  %393 = vmatpush1.bf16.msra.mxu0 0
  %394 = vmatprep.subr.bf16.mxu0 0
  %395 = vmatpush1.bf16.msra.mxu0 0
  %396 = vmatprep.subr.bf16.mxu0 0
  %397 = vmatpush1.bf16.msra.mxu0 0
  %398 = vmatprep.subr.bf16.mxu0 0
  %399 = vmatpush1.bf16.msra.mxu0 0
  %400 = vmatprep.subr.bf16.mxu0 0
  %401 = vmatpush1.bf16.msra.mxu0 0
  %402 = vmatprep.mubr.bf16.mxu0 0
  %403 = vmatmul.mubr.bf16.gmra.mrb[0].mxu0 %v365
  %v404 = vpop.f32.mrb[0].mxu0
  %v405 = vadd.f32 0.0, %v404
  %v406 = vpop.f32.mrb[0].mxu0
  %v407 = vpop.f32.mrb[0].mxu0
  %v408 = vadd.f32 0.0, %v407
  %v409 = vpop.f32.mrb[0].mxu0
  %410 = vmatprep.mubr.bf16.mxu0 0
  %411 = vmatmul.mubr.bf16.gmra.mrb[0].mxu0 %v368
  %v412 = vpop.f32.mrb[0].mxu0
  %v413 = vadd.f32 0.0, %v412
  %v414 = vpop.f32.mrb[0].mxu0
  %v415 = vpop.f32.mrb[0].mxu0
  %v416 = vadd.f32 0.0, %v415
  %v417 = vpop.f32.mrb[0].mxu0
  %418 = vdwg.mxu0
  %v419 = vadd.f32 %v340, %v405
  %v420 = vadd.f32 %v341, %v408
  %v421 = vadd.f32 %v342, %v413
  %v422 = vadd.f32 %v343, %v416
  %v423 = vld [vmem:[%s2 + $0x560] sm:$0x1]
  %v424 = vlaneseq
  %v425 = vshrl.u32 %v424, 7
  %v426 = vsub.s32 0, %v425
  %v427 = vrot.slane %v423, %v426
  %v428 = vadd.f32 %v419, %v427
  %v429 = vadd.f32 %v420, %v427
  %v430 = vadd.f32 %v421, %v427
  %v431 = vadd.f32 %v422, %v427
  %v432 = vld [vmem:[%s2 + $0x460] sm:$0xff]
  %v433 = vld [vmem:[%s2 + $0x468] sm:$0xff]
  %v434 = vld [vmem:[%s2 + $0x470] sm:$0xff]
  %v435 = vld [vmem:[%s2 + $0x478] sm:$0xff]
  %v436 = vld [vmem:[%s2 + $0x480] sm:$0xff]
  %v437 = vld [vmem:[%s2 + $0x488] sm:$0xff]
  %v438 = vld [vmem:[%s2 + $0x490] sm:$0xff]
  %v439 = vld [vmem:[%s2 + $0x498] sm:$0xff]
  %vm440 = vcmask 523264
  %v441 = vsel %vm440, %v428, 0.0
  %v442 = vsel %vm440, %v429, 0.0
  %v443 = vadd.f32 %v441, %v442
  %v444 = vsel %vm440, %v430, 0.0
  %v445 = vadd.f32 %v443, %v444
  %v446 = vsel %vm440, %v431, 0.0
  %v447 = vadd.f32 %v445, %v446
  %v448 = vrot.slane %v447, 4
  %v449 = vadd.f32 %v447, %v448
  %v450 = vrot.slane %v449, 2
  %v451 = vadd.f32 %v449, %v450
  %v452 = vrot.slane %v451, 1
  %v453 = vadd.f32 %v451, %v452
  %v455 = vsel %vm440, %v453, 0
  %457 = vmatprep.subr.mxu0 0.0
  %458 = vmatpush1.msra.mxu0 %v432
  %459 = vmatprep.subr.mxu0 0.0
  %460 = vmatpush1.msra.mxu0 %v433
  %461 = vmatprep.subr.mxu0 0.0
  %462 = vmatpush1.msra.mxu0 %v434
  %463 = vmatprep.subr.mxu0 0.0
  %464 = vmatpush1.msra.mxu0 %v435
  %465 = vmatprep.subr.mxu0 0.0
  %466 = vmatpush1.msra.mxu0 %v436
  %467 = vmatprep.subr.mxu0 0.0
  %468 = vmatpush1.msra.mxu0 %v437
  %469 = vmatprep.subr.mxu0 0.0
  %470 = vmatpush1.msra.mxu0 %v438
  %471 = vmatprep.subr.mxu0 0.0
  %472 = vmatpush1.msra.mxu0 %v439
  %473 = vmatprep.subr.mxu0 0.0
  %474 = vmatpush1.msra.mxu0 0.0
  %475 = vmatprep.subr.mxu0 0.0
  %476 = vmatpush1.msra.mxu0 0.0
  %477 = vmatprep.subr.mxu0 0.0
  %478 = vmatpush1.msra.mxu0 0.0
  %479 = vmatprep.subr.mxu0 0.0
  %480 = vmatpush1.msra.mxu0 0.0
  %481 = vmatprep.subr.mxu0 0.0
  %482 = vmatpush1.msra.mxu0 0.0
  %483 = vmatprep.subr.mxu0 0.0
  %484 = vmatpush1.msra.mxu0 0.0
  %485 = vmatprep.subr.mxu0 0.0
  %486 = vmatpush1.msra.mxu0 0.0
  %487 = vmatprep.subr.mxu0 0.0
  %488 = vmatpush1.msra.mxu0 0.0
  %489 = vmatprep.subr.mxu0 0.0
  %490 = vmatpush1.msra.mxu0 0.0
  %491 = vmatprep.subr.mxu0 0.0
  %492 = vmatpush1.msra.mxu0 0.0
  %493 = vmatprep.subr.mxu0 0.0
  %494 = vmatpush1.msra.mxu0 0.0
  %495 = vmatprep.subr.mxu0 0.0
  %496 = vmatpush1.msra.mxu0 0.0
  %497 = vmatprep.subr.mxu0 0.0
  %498 = vmatpush1.msra.mxu0 0.0
  %499 = vmatprep.subr.mxu0 0.0
  %500 = vmatpush1.msra.mxu0 0.0
  %501 = vmatprep.subr.mxu0 0.0
  %502 = vmatpush1.msra.mxu0 0.0
  %503 = vmatprep.subr.mxu0 0.0
  %504 = vmatpush1.msra.mxu0 0.0
  %505 = vmatprep.subr.mxu0 0.0
  %506 = vmatpush1.msra.mxu0 0.0
  %507 = vmatprep.subr.mxu0 0.0
  %508 = vmatpush1.msra.mxu0 0.0
  %509 = vmatprep.subr.mxu0 0.0
  %510 = vmatpush1.msra.mxu0 0.0
  %511 = vmatprep.subr.mxu0 0.0
  %512 = vmatpush1.msra.mxu0 0.0
  %513 = vmatprep.subr.mxu0 0.0
  %514 = vmatpush1.msra.mxu0 0.0
  %515 = vmatprep.subr.mxu0 0.0
  %516 = vmatpush1.msra.mxu0 0.0
  %517 = vmatprep.subr.mxu0 0.0
  %518 = vmatpush1.msra.mxu0 0.0
  %519 = vmatprep.subr.mxu0 0.0
  %520 = vmatpush1.msra.mxu0 0.0
  %521 = vmatprep.mubr.f32.mxu0 0.0
  %522 = vmatmul.mubr.f32.gmra.mrb[0].mxu0 %v455
  %v523 = vpop.f32.mrb[0].mxu0
  %v524 = vadd.f32 0.0, %v523
  %v525 = vpop.f32.mrb[0].mxu0
  %526 = vdwg.mxu0
  %v527 = vmul.f32 %v428, %v428
  %v528 = vmul.f32 %v429, %v429
  %v529 = vmul.f32 %v430, %v430
  %v530 = vmul.f32 %v431, %v431
  %v531 = vsel %vm440, %v527, 0.0
  %v532 = vsel %vm440, %v528, 0.0
  %v533 = vadd.f32 %v531, %v532
  %v534 = vsel %vm440, %v529, 0.0
  %v535 = vadd.f32 %v533, %v534
  %v536 = vsel %vm440, %v530, 0.0
  %v537 = vadd.f32 %v535, %v536
  %v538 = vrot.slane %v537, 4
  %v539 = vadd.f32 %v537, %v538
  %v540 = vrot.slane %v539, 2
  %v541 = vadd.f32 %v539, %v540
  %v542 = vrot.slane %v541, 1
  %v543 = vadd.f32 %v541, %v542
  %v545 = vsel %vm440, %v543, 0
  %547 = vmatprep.subr.mxu0 0.0
  %548 = vmatpush1.msra.mxu0 %v432
  %549 = vmatprep.subr.mxu0 0.0
  %550 = vmatpush1.msra.mxu0 %v433
  %551 = vmatprep.subr.mxu0 0.0
  %552 = vmatpush1.msra.mxu0 %v434
  %553 = vmatprep.subr.mxu0 0.0
  %554 = vmatpush1.msra.mxu0 %v435
  %555 = vmatprep.subr.mxu0 0.0
  %556 = vmatpush1.msra.mxu0 %v436
  %557 = vmatprep.subr.mxu0 0.0
  %558 = vmatpush1.msra.mxu0 %v437
  %559 = vmatprep.subr.mxu0 0.0
  %560 = vmatpush1.msra.mxu0 %v438
  %561 = vmatprep.subr.mxu0 0.0
  %562 = vmatpush1.msra.mxu0 %v439
  %563 = vmatprep.subr.mxu0 0.0
  %564 = vmatpush1.msra.mxu0 0.0
  %565 = vmatprep.subr.mxu0 0.0
  %566 = vmatpush1.msra.mxu0 0.0
  %567 = vmatprep.subr.mxu0 0.0
  %568 = vmatpush1.msra.mxu0 0.0
  %569 = vmatprep.subr.mxu0 0.0
  %570 = vmatpush1.msra.mxu0 0.0
  %571 = vmatprep.subr.mxu0 0.0
  %572 = vmatpush1.msra.mxu0 0.0
  %573 = vmatprep.subr.mxu0 0.0
  %574 = vmatpush1.msra.mxu0 0.0
  %575 = vmatprep.subr.mxu0 0.0
  %576 = vmatpush1.msra.mxu0 0.0
  %577 = vmatprep.subr.mxu0 0.0
  %578 = vmatpush1.msra.mxu0 0.0
  %579 = vmatprep.subr.mxu0 0.0
  %580 = vmatpush1.msra.mxu0 0.0
  %581 = vmatprep.subr.mxu0 0.0
  %582 = vmatpush1.msra.mxu0 0.0
  %583 = vmatprep.subr.mxu0 0.0
  %584 = vmatpush1.msra.mxu0 0.0
  %585 = vmatprep.subr.mxu0 0.0
  %586 = vmatpush1.msra.mxu0 0.0
  %587 = vmatprep.subr.mxu0 0.0
  %588 = vmatpush1.msra.mxu0 0.0
  %589 = vmatprep.subr.mxu0 0.0
  %590 = vmatpush1.msra.mxu0 0.0
  %591 = vmatprep.subr.mxu0 0.0
  %592 = vmatpush1.msra.mxu0 0.0
  %593 = vmatprep.subr.mxu0 0.0
  %594 = vmatpush1.msra.mxu0 0.0
  %595 = vmatprep.subr.mxu0 0.0
  %596 = vmatpush1.msra.mxu0 0.0
  %597 = vmatprep.subr.mxu0 0.0
  %598 = vmatpush1.msra.mxu0 0.0
  %599 = vmatprep.subr.mxu0 0.0
  %600 = vmatpush1.msra.mxu0 0.0
  %601 = vmatprep.subr.mxu0 0.0
  %602 = vmatpush1.msra.mxu0 0.0
  %603 = vmatprep.subr.mxu0 0.0
  %604 = vmatpush1.msra.mxu0 0.0
  %605 = vmatprep.subr.mxu0 0.0
  %606 = vmatpush1.msra.mxu0 0.0
  %607 = vmatprep.subr.mxu0 0.0
  %608 = vmatpush1.msra.mxu0 0.0
  %609 = vmatprep.subr.mxu0 0.0
  %610 = vmatpush1.msra.mxu0 0.0
  %611 = vmatprep.mubr.f32.mxu0 0.0
  %612 = vmatmul.mubr.f32.gmra.mrb[0].mxu0 %v545
  %v613 = vpop.f32.mrb[0].mxu0
  %v614 = vadd.f32 0.0, %v613
  %v615 = vpop.f32.mrb[0].mxu0
  %616 = vdwg.mxu0
  %v617 = vmul.f32 %v524, %v524
  %v618 = vsub.f32 %v614, %v617
  %v619 = vld [vmem:[%s2 + $0x561] sm:$0x1]
  %v620 = vadd.f32 %v618, 1e-05
  %v621 = vrsqrt.pop %v620
  %v622 = vmul.f32 %v619, %v621
  %v623 = vlaneseq
  %v624 = vshrl.u32 %v623, 7
  %v625 = vsub.s32 0, %v624
  %v626 = vrot.slane %v524, %v625
  %v627 = vsub.f32 %v428, %v626
  %v628 = vsub.f32 %v429, %v626
  %v629 = vsub.f32 %v430, %v626
  %v630 = vsub.f32 %v431, %v626
  %v631 = vlaneseq
  %v632 = vshrl.u32 %v631, 7
  %v633 = vsub.s32 0, %v632
  %v634 = vrot.slane %v622, %v633
  %v635 = vmul.f32 %v627, %v634
  %v636 = vmul.f32 %v628, %v634
  %v637 = vmul.f32 %v629, %v634
  %v638 = vmul.f32 %v630, %v634
  %v639 = vld [vmem:[%s2 + $0x562] sm:$0x1]
  %v640 = vlaneseq
  %v641 = vshrl.u32 %v640, 7
  %v642 = vsub.s32 0, %v641
  %v643 = vrot.slane %v639, %v642
  %v644 = vadd.f32 %v635, %v643
  %v645 = vadd.f32 %v636, %v643
  %v646 = vadd.f32 %v637, %v643
  %v647 = vadd.f32 %v638, %v643
  %v648 = vmax.f32 %v644, 0.0
  %v649 = vmax.f32 %v645, 0.0
  %v650 = vmax.f32 %v646, 0.0
  %v651 = vmax.f32 %v647, 0.0
  %v656 = vcombine.high %v648, %v648
  %v658 = vunpack.c.l.s4 1983009808
  %v659 = vunpack.c.0.s8 %v658
  %v660 = vlaneseq
  %v661 = vshrl.u32 %v660, 7
  %v662 = vsub.s32 %v659, %v661
  %v663 = vrot.slane %v648, %v662
  %v665 = vunpack.c.l.s4 1983009808
  %v666 = vunpack.c.0.s8 %v665
  %v667 = vlaneseq
  %v668 = vshrl.u32 %v667, 7
  %v669 = vsub.s32 %v666, %v668
  %v670 = vrot.slane %v656, %v669
  %v671 = vcombine.high %v663, %v663
  %v672 = vcombine.high %v670, %v670
  %v673 = vcombine.high %v649, %v649
  %v675 = vunpack.c.l.s4 1983009808
  %v676 = vunpack.c.0.s8 %v675
  %v677 = vlaneseq
  %v678 = vshrl.u32 %v677, 7
  %v679 = vsub.s32 %v676, %v678
  %v680 = vrot.slane %v649, %v679
  %v682 = vunpack.c.l.s4 1983009808
  %v683 = vunpack.c.0.s8 %v682
  %v684 = vlaneseq
  %v685 = vshrl.u32 %v684, 7
  %v686 = vsub.s32 %v683, %v685
  %v687 = vrot.slane %v673, %v686
  %v688 = vcombine.high %v680, %v680
  %v689 = vcombine.high %v687, %v687
  %v690 = vcombine.high %v650, %v650
  %v692 = vunpack.c.l.s4 1983009808
  %v693 = vunpack.c.0.s8 %v692
  %v694 = vlaneseq
  %v695 = vshrl.u32 %v694, 7
  %v696 = vsub.s32 %v693, %v695
  %v697 = vrot.slane %v650, %v696
  %v699 = vunpack.c.l.s4 1983009808
  %v700 = vunpack.c.0.s8 %v699
  %v701 = vlaneseq
  %v702 = vshrl.u32 %v701, 7
  %v703 = vsub.s32 %v700, %v702
  %v704 = vrot.slane %v690, %v703
  %v705 = vcombine.high %v697, %v697
  %v706 = vcombine.high %v704, %v704
  %v707 = vcombine.high %v651, %v651
  %v709 = vunpack.c.l.s4 1983009808
  %v710 = vunpack.c.0.s8 %v709
  %v711 = vlaneseq
  %v712 = vshrl.u32 %v711, 7
  %v713 = vsub.s32 %v710, %v712
  %v714 = vrot.slane %v651, %v713
  %v716 = vunpack.c.l.s4 1983009808
  %v717 = vunpack.c.0.s8 %v716
  %v718 = vlaneseq
  %v719 = vshrl.u32 %v718, 7
  %v720 = vsub.s32 %v717, %v719
  %v721 = vrot.slane %v707, %v720
  %v722 = vcombine.high %v714, %v714
  %v723 = vcombine.high %v721, %v721
  %vm724 = vcmask 516096
  %725 = vst.msk [vmem:[#allocation2] sm:$0x1] %vm724, 0.0
  %726 = vst.msk [vmem:[#allocation2 + $0x10] sm:$0x1] %vm724, 0.0
  %727 = vst.msk [vmem:[#allocation2 + $0x9] sm:$0x1] %vm724, 0.0
  %728 = vst.msk [vmem:[#allocation2 + $0x19] sm:$0x1] %vm724, 0.0
  %v729 = vlaneseq
  %v730 = vshrl.u32 %v729, 7
  %v731 = vsub.s32 0, %v730
  %v732 = vrot.slane %v663, %v731
  %v733 = vlaneseq
  %v734 = vshrl.u32 %v733, 7
  %v735 = vsub.s32 0, %v734
  %v736 = vrot.slane %v671, %v735
  %v737 = vlaneseq
  %v738 = vshrl.u32 %v737, 7
  %v739 = vsub.s32 0, %v738
  %v740 = vrot.slane %v670, %v739
  %v741 = vlaneseq
  %v742 = vshrl.u32 %v741, 7
  %v743 = vsub.s32 0, %v742
  %v744 = vrot.slane %v672, %v743
  %v745 = vlaneseq
  %v746 = vshrl.u32 %v745, 7
  %v747 = vsub.s32 0, %v746
  %v748 = vrot.slane %v680, %v747
  %v749 = vlaneseq
  %v750 = vshrl.u32 %v749, 7
  %v751 = vsub.s32 0, %v750
  %v752 = vrot.slane %v688, %v751
  %v753 = vlaneseq
  %v754 = vshrl.u32 %v753, 7
  %v755 = vsub.s32 0, %v754
  %v756 = vrot.slane %v687, %v755
  %v757 = vlaneseq
  %v758 = vshrl.u32 %v757, 7
  %v759 = vsub.s32 0, %v758
  %v760 = vrot.slane %v689, %v759
  %v761 = vlaneseq
  %v762 = vshrl.u32 %v761, 7
  %v763 = vsub.s32 0, %v762
  %v764 = vrot.slane %v697, %v763
  %v765 = vlaneseq
  %v766 = vshrl.u32 %v765, 7
  %v767 = vsub.s32 0, %v766
  %v768 = vrot.slane %v705, %v767
  %v769 = vlaneseq
  %v770 = vshrl.u32 %v769, 7
  %v771 = vsub.s32 0, %v770
  %v772 = vrot.slane %v704, %v771
  %v773 = vlaneseq
  %v774 = vshrl.u32 %v773, 7
  %v775 = vsub.s32 0, %v774
  %v776 = vrot.slane %v706, %v775
  %v777 = vlaneseq
  %v778 = vshrl.u32 %v777, 7
  %v779 = vsub.s32 0, %v778
  %v780 = vrot.slane %v714, %v779
  %v781 = vlaneseq
  %v782 = vshrl.u32 %v781, 7
  %v783 = vsub.s32 0, %v782
  %v784 = vrot.slane %v722, %v783
  %v785 = vlaneseq
  %v786 = vshrl.u32 %v785, 7
  %v787 = vsub.s32 0, %v786
  %v788 = vrot.slane %v721, %v787
  %v789 = vlaneseq
  %v790 = vshrl.u32 %v789, 7
  %v791 = vsub.s32 0, %v790
  %v792 = vrot.slane %v723, %v791
  %vm793 = vcmask 1041409
  %v794 = vsel %vm793, %v736, %v732
  %vm795 = vcmask 1042434
  %v796 = vsel %vm795, %v740, %v794
  %vm797 = vcmask 1043459
  %v798 = vsel %vm797, %v744, %v796
  %vm799 = vcmask 1044484
  %v800 = vsel %vm799, %v748, %v798
  %vm801 = vcmask 1045509
  %v802 = vsel %vm801, %v752, %v800
  %vm803 = vcmask 1046534
  %v804 = vsel %vm803, %v756, %v802
  %vm805 = vcmask 1047559
  %v806 = vsel %vm805, %v760, %v804
  %v807 = vsel %vm793, %v768, %v764
  %v808 = vsel %vm795, %v772, %v807
  %v809 = vsel %vm797, %v776, %v808
  %v810 = vsel %vm799, %v780, %v809
  %v811 = vsel %vm801, %v784, %v810
  %v812 = vsel %vm803, %v788, %v811
  %v813 = vsel %vm805, %v792, %v812
  %816 = vst.msk [vmem:[#allocation2 + $0x1] sm:$0xff] %vm440, %v806
  %817 = vst.msk [vmem:[#allocation2 + $0x11] sm:$0xff] %vm440, %v813
  %818 = vst.msk [vmem:[#allocation3] sm:$0x1] %vm724, 0.0
  %819 = vst.msk [vmem:[#allocation3 + $0x10] sm:$0x1] %vm724, 0.0
  %820 = vst.msk [vmem:[#allocation3 + $0x9] sm:$0x1] %vm724, 0.0
  %821 = vst.msk [vmem:[#allocation3 + $0x19] sm:$0x1] %vm724, 0.0
  %v822 = vlaneseq
  %v823 = vshrl.u32 %v822, 7
  %v824 = vsub.s32 1, %v823
  %v825 = vrot.slane %v663, %v824
  %v826 = vlaneseq
  %v827 = vshrl.u32 %v826, 7
  %v828 = vsub.s32 1, %v827
  %v829 = vrot.slane %v671, %v828
  %v830 = vlaneseq
  %v831 = vshrl.u32 %v830, 7
  %v832 = vsub.s32 1, %v831
  %v833 = vrot.slane %v670, %v832
  %v834 = vlaneseq
  %v835 = vshrl.u32 %v834, 7
  %v836 = vsub.s32 1, %v835
  %v837 = vrot.slane %v672, %v836
  %v838 = vlaneseq
  %v839 = vshrl.u32 %v838, 7
  %v840 = vsub.s32 1, %v839
  %v841 = vrot.slane %v680, %v840
  %v842 = vlaneseq
  %v843 = vshrl.u32 %v842, 7
  %v844 = vsub.s32 1, %v843
  %v845 = vrot.slane %v688, %v844
  %v846 = vlaneseq
  %v847 = vshrl.u32 %v846, 7
  %v848 = vsub.s32 1, %v847
  %v849 = vrot.slane %v687, %v848
  %v850 = vlaneseq
  %v851 = vshrl.u32 %v850, 7
  %v852 = vsub.s32 1, %v851
  %v853 = vrot.slane %v689, %v852
  %v854 = vlaneseq
  %v855 = vshrl.u32 %v854, 7
  %v856 = vsub.s32 1, %v855
  %v857 = vrot.slane %v697, %v856
  %v858 = vlaneseq
  %v859 = vshrl.u32 %v858, 7
  %v860 = vsub.s32 1, %v859
  %v861 = vrot.slane %v705, %v860
  %v862 = vlaneseq
  %v863 = vshrl.u32 %v862, 7
  %v864 = vsub.s32 1, %v863
  %v865 = vrot.slane %v704, %v864
  %v866 = vlaneseq
  %v867 = vshrl.u32 %v866, 7
  %v868 = vsub.s32 1, %v867
  %v869 = vrot.slane %v706, %v868
  %v870 = vlaneseq
  %v871 = vshrl.u32 %v870, 7
  %v872 = vsub.s32 1, %v871
  %v873 = vrot.slane %v714, %v872
  %v874 = vlaneseq
  %v875 = vshrl.u32 %v874, 7
  %v876 = vsub.s32 1, %v875
  %v877 = vrot.slane %v722, %v876
  %v878 = vlaneseq
  %v879 = vshrl.u32 %v878, 7
  %v880 = vsub.s32 1, %v879
  %v881 = vrot.slane %v721, %v880
  %v882 = vlaneseq
  %v883 = vshrl.u32 %v882, 7
  %v884 = vsub.s32 1, %v883
  %v885 = vrot.slane %v723, %v884
  %v886 = vsel %vm795, %v829, %v825
  %v887 = vsel %vm797, %v833, %v886
  %v888 = vsel %vm799, %v837, %v887
  %v889 = vsel %vm801, %v841, %v888
  %v890 = vsel %vm803, %v845, %v889
  %v891 = vsel %vm805, %v849, %v890
  %v892 = vsel %vm795, %v861, %v857
  %v893 = vsel %vm797, %v865, %v892
  %v894 = vsel %vm799, %v869, %v893
  %v895 = vsel %vm801, %v873, %v894
  %v896 = vsel %vm803, %v877, %v895
  %v897 = vsel %vm805, %v881, %v896
  %vm902 = vcmask 523265
  %903 = vst.msk [vmem:[#allocation3] sm:$0xfe] %vm902, %v891
  %904 = vst.msk [vmem:[#allocation3 + $0x8] sm:$0x1] %vm724, %v853
  %905 = vst.msk [vmem:[#allocation3 + $0x10] sm:$0xfe] %vm902, %v897
  %906 = vst.msk [vmem:[#allocation3 + $0x18] sm:$0x1] %vm724, %v885
  %v907 = vld [vmem:[#allocation2] sm:$0xff]
  %v908 = vld [vmem:[#allocation2 + $0x10] sm:$0xff]
  %v909 = vld [vmem:[#allocation3] sm:$0xff]
  %v910 = vld [vmem:[#allocation3 + $0x10] sm:$0xff]
  %v911 = vld [vmem:[#allocation2 + $0x1] sm:$0xff]
  %v912 = vld [vmem:[#allocation2 + $0x11] sm:$0xff]
  %v913 = vld [vmem:[#allocation3 + $0x1] sm:$0xff]
  %v914 = vld [vmem:[#allocation3 + $0x11] sm:$0xff]
  %v915 = vld [vmem:[#allocation2 + $0x2] sm:$0xff]
  %v916 = vld [vmem:[#allocation2 + $0x12] sm:$0xff]
  %v917 = vpack.c.bf16 %v908, %v907
  %v918 = vld [vmem:[%s2 + $0x1e0] sm:$0xff]
  %v919 = vld [vmem:[%s2 + $0x1e8] sm:$0xff]
  %v920 = vld [vmem:[%s2 + $0x1f0] sm:$0xff]
  %v921 = vld [vmem:[%s2 + $0x1f8] sm:$0xff]
  %v922 = vld [vmem:[%s2 + $0x200] sm:$0xff]
  %v923 = vld [vmem:[%s2 + $0x208] sm:$0xff]
  %v924 = vld [vmem:[%s2 + $0x210] sm:$0xff]
  %v925 = vld [vmem:[%s2 + $0x218] sm:$0xff]
  %v926 = vpack.c.bf16 %v919, %v918
  %v927 = vpack.c.bf16 %v921, %v920
  %v928 = vpack.c.bf16 %v923, %v922
  %v929 = vpack.c.bf16 %v925, %v924
  %v930 = vpack.c.bf16 %v910, %v909
  %v931 = vld [vmem:[%s2 + $0x220] sm:$0xff]
  %v932 = vld [vmem:[%s2 + $0x228] sm:$0xff]
  %v933 = vld [vmem:[%s2 + $0x230] sm:$0xff]
  %v934 = vld [vmem:[%s2 + $0x238] sm:$0xff]
  %v935 = vld [vmem:[%s2 + $0x240] sm:$0xff]
  %v936 = vld [vmem:[%s2 + $0x248] sm:$0xff]
  %v937 = vld [vmem:[%s2 + $0x250] sm:$0xff]
  %v938 = vld [vmem:[%s2 + $0x258] sm:$0xff]
  %v939 = vpack.c.bf16 %v932, %v931
  %v940 = vpack.c.bf16 %v934, %v933
  %v941 = vpack.c.bf16 %v936, %v935
  %v942 = vpack.c.bf16 %v938, %v937
  %v944 = vsel %vm440, %v930, 0
  %946 = vmatprep.subr.bf16.mxu0 0
  %947 = vmatpush1.bf16.msra.mxu0 %v939
  %948 = vmatprep.subr.bf16.mxu0 0
  %949 = vmatpush1.bf16.msra.mxu0 %v940
  %950 = vmatprep.subr.bf16.mxu0 0
  %951 = vmatpush1.bf16.msra.mxu0 %v941
  %952 = vmatprep.subr.bf16.mxu0 0
  %953 = vmatpush1.bf16.msra.mxu0 %v942
  %954 = vmatprep.subr.bf16.mxu0 0
  %955 = vmatpush1.bf16.msra.mxu0 0
  %956 = vmatprep.subr.bf16.mxu0 0
  %957 = vmatpush1.bf16.msra.mxu0 0
  %958 = vmatprep.subr.bf16.mxu0 0
  %959 = vmatpush1.bf16.msra.mxu0 0
  %960 = vmatprep.subr.bf16.mxu0 0
  %961 = vmatpush1.bf16.msra.mxu0 0
  %962 = vmatprep.subr.bf16.mxu0 0
  %963 = vmatpush1.bf16.msra.mxu0 0
  %964 = vmatprep.subr.bf16.mxu0 0
  %965 = vmatpush1.bf16.msra.mxu0 0
  %966 = vmatprep.subr.bf16.mxu0 0
  %967 = vmatpush1.bf16.msra.mxu0 0
  %968 = vmatprep.subr.bf16.mxu0 0
  %969 = vmatpush1.bf16.msra.mxu0 0
  %970 = vmatprep.subr.bf16.mxu0 0
  %971 = vmatpush1.bf16.msra.mxu0 0
  %972 = vmatprep.subr.bf16.mxu0 0
  %973 = vmatpush1.bf16.msra.mxu0 0
  %974 = vmatprep.subr.bf16.mxu0 0
  %975 = vmatpush1.bf16.msra.mxu0 0
  %976 = vmatprep.subr.bf16.mxu0 0
  %977 = vmatpush1.bf16.msra.mxu0 0
  %978 = vmatprep.mubr.bf16.mxu0 0
  %979 = vmatmul.mubr.bf16.gmra.mrb[0].mxu0 %v944
  %v980 = vpop.f32.mrb[0].mxu0
  %v981 = vadd.f32 0.0, %v980
  %v982 = vpop.f32.mrb[0].mxu0
  %v983 = vpop.f32.mrb[0].mxu0
  %v984 = vadd.f32 0.0, %v983
  %v985 = vpop.f32.mrb[0].mxu0
  %986 = vdwg.mxu0
  %v988 = vsel %vm440, %v917, 0
  %990 = vmatprep.subr.bf16.mxu0 0
  %991 = vmatpush1.bf16.msra.mxu0 %v926
  %992 = vmatprep.subr.bf16.mxu0 0
  %993 = vmatpush1.bf16.msra.mxu0 %v927
  %994 = vmatprep.subr.bf16.mxu0 0
  %995 = vmatpush1.bf16.msra.mxu0 %v928
  %996 = vmatprep.subr.bf16.mxu0 0
  %997 = vmatpush1.bf16.msra.mxu0 %v929
  %998 = vmatprep.subr.bf16.mxu0 0
  %999 = vmatpush1.bf16.msra.mxu0 0
  %1000 = vmatprep.subr.bf16.mxu0 0
  %1001 = vmatpush1.bf16.msra.mxu0 0
  %1002 = vmatprep.subr.bf16.mxu0 0
  %1003 = vmatpush1.bf16.msra.mxu0 0
  %1004 = vmatprep.subr.bf16.mxu0 0
  %1005 = vmatpush1.bf16.msra.mxu0 0
  %1006 = vmatprep.subr.bf16.mxu0 0
  %1007 = vmatpush1.bf16.msra.mxu0 0
  %1008 = vmatprep.subr.bf16.mxu0 0
  %1009 = vmatpush1.bf16.msra.mxu0 0
  %1010 = vmatprep.subr.bf16.mxu0 0
  %1011 = vmatpush1.bf16.msra.mxu0 0
  %1012 = vmatprep.subr.bf16.mxu0 0
  %1013 = vmatpush1.bf16.msra.mxu0 0
  %1014 = vmatprep.subr.bf16.mxu0 0
  %1015 = vmatpush1.bf16.msra.mxu0 0
  %1016 = vmatprep.subr.bf16.mxu0 0
  %1017 = vmatpush1.bf16.msra.mxu0 0
  %1018 = vmatprep.subr.bf16.mxu0 0
  %1019 = vmatpush1.bf16.msra.mxu0 0
  %1020 = vmatprep.subr.bf16.mxu0 0
  %1021 = vmatpush1.bf16.msra.mxu0 0
  %1022 = vmatprep.mubr.bf16.mxu0 0
  %1023 = vmatmul.mubr.bf16.gmra.mrb[0].mxu0 %v988
  %v1024 = vpop.f32.mrb[0].mxu0
  %v1025 = vadd.f32 %v981, %v1024
  %v1026 = vpop.f32.mrb[0].mxu0
  %v1027 = vpop.f32.mrb[0].mxu0
  %v1028 = vadd.f32 %v984, %v1027
  %v1029 = vpop.f32.mrb[0].mxu0
  %1030 = vdwg.mxu0
  %v1031 = vpack.c.bf16 %v912, %v911
  %v1032 = vld [vmem:[%s2 + $0x260] sm:$0xff]
  %v1033 = vld [vmem:[%s2 + $0x268] sm:$0xff]
  %v1034 = vld [vmem:[%s2 + $0x270] sm:$0xff]
  %v1035 = vld [vmem:[%s2 + $0x278] sm:$0xff]
  %v1036 = vld [vmem:[%s2 + $0x280] sm:$0xff]
  %v1037 = vld [vmem:[%s2 + $0x288] sm:$0xff]
  %v1038 = vld [vmem:[%s2 + $0x290] sm:$0xff]
  %v1039 = vld [vmem:[%s2 + $0x298] sm:$0xff]
  %v1040 = vpack.c.bf16 %v1033, %v1032
  %v1041 = vpack.c.bf16 %v1035, %v1034
  %v1042 = vpack.c.bf16 %v1037, %v1036
  %v1043 = vpack.c.bf16 %v1039, %v1038
  %v1045 = vsel %vm440, %v1031, 0
  %1047 = vmatprep.subr.bf16.mxu0 0
  %1048 = vmatpush1.bf16.msra.mxu0 %v1040
  %1049 = vmatprep.subr.bf16.mxu0 0
  %1050 = vmatpush1.bf16.msra.mxu0 %v1041
  %1051 = vmatprep.subr.bf16.mxu0 0
  %1052 = vmatpush1.bf16.msra.mxu0 %v1042
  %1053 = vmatprep.subr.bf16.mxu0 0
  %1054 = vmatpush1.bf16.msra.mxu0 %v1043
  %1055 = vmatprep.subr.bf16.mxu0 0
  %1056 = vmatpush1.bf16.msra.mxu0 0
  %1057 = vmatprep.subr.bf16.mxu0 0
  %1058 = vmatpush1.bf16.msra.mxu0 0
  %1059 = vmatprep.subr.bf16.mxu0 0
  %1060 = vmatpush1.bf16.msra.mxu0 0
  %1061 = vmatprep.subr.bf16.mxu0 0
  %1062 = vmatpush1.bf16.msra.mxu0 0
  %1063 = vmatprep.subr.bf16.mxu0 0
  %1064 = vmatpush1.bf16.msra.mxu0 0
  %1065 = vmatprep.subr.bf16.mxu0 0
  %1066 = vmatpush1.bf16.msra.mxu0 0
  %1067 = vmatprep.subr.bf16.mxu0 0
  %1068 = vmatpush1.bf16.msra.mxu0 0
  %1069 = vmatprep.subr.bf16.mxu0 0
  %1070 = vmatpush1.bf16.msra.mxu0 0
  %1071 = vmatprep.subr.bf16.mxu0 0
  %1072 = vmatpush1.bf16.msra.mxu0 0
  %1073 = vmatprep.subr.bf16.mxu0 0
  %1074 = vmatpush1.bf16.msra.mxu0 0
  %1075 = vmatprep.subr.bf16.mxu0 0
  %1076 = vmatpush1.bf16.msra.mxu0 0
  %1077 = vmatprep.subr.bf16.mxu0 0
  %1078 = vmatpush1.bf16.msra.mxu0 0
  %1079 = vmatprep.mubr.bf16.mxu0 0
  %1080 = vmatmul.mubr.bf16.gmra.mrb[0].mxu0 %v1045
  %v1081 = vpop.f32.mrb[0].mxu0
  %v1082 = vadd.f32 0.0, %v1081
  %v1083 = vpop.f32.mrb[0].mxu0
  %v1084 = vpop.f32.mrb[0].mxu0
  %v1085 = vadd.f32 0.0, %v1084
  %v1086 = vpop.f32.mrb[0].mxu0
  %1087 = vdwg.mxu0
  %v1088 = vadd.f32 %v1025, %v1082
  %v1089 = vadd.f32 %v1028, %v1085
  %v1090 = vpack.c.bf16 %v914, %v913
  %v1091 = vld [vmem:[%s2 + $0x2a0] sm:$0xff]
  %v1092 = vld [vmem:[%s2 + $0x2a8] sm:$0xff]
  %v1093 = vld [vmem:[%s2 + $0x2b0] sm:$0xff]
  %v1094 = vld [vmem:[%s2 + $0x2b8] sm:$0xff]
  %v1095 = vld [vmem:[%s2 + $0x2c0] sm:$0xff]
  %v1096 = vld [vmem:[%s2 + $0x2c8] sm:$0xff]
  %v1097 = vld [vmem:[%s2 + $0x2d0] sm:$0xff]
  %v1098 = vld [vmem:[%s2 + $0x2d8] sm:$0xff]
  %v1099 = vpack.c.bf16 %v1092, %v1091
  %v1100 = vpack.c.bf16 %v1094, %v1093
  %v1101 = vpack.c.bf16 %v1096, %v1095
  %v1102 = vpack.c.bf16 %v1098, %v1097
  %v1104 = vsel %vm440, %v1090, 0
  %1106 = vmatprep.subr.bf16.mxu0 0
  %1107 = vmatpush1.bf16.msra.mxu0 %v1099
  %1108 = vmatprep.subr.bf16.mxu0 0
  %1109 = vmatpush1.bf16.msra.mxu0 %v1100
  %1110 = vmatprep.subr.bf16.mxu0 0
  %1111 = vmatpush1.bf16.msra.mxu0 %v1101
  %1112 = vmatprep.subr.bf16.mxu0 0
  %1113 = vmatpush1.bf16.msra.mxu0 %v1102
  %1114 = vmatprep.subr.bf16.mxu0 0
  %1115 = vmatpush1.bf16.msra.mxu0 0
  %1116 = vmatprep.subr.bf16.mxu0 0
  %1117 = vmatpush1.bf16.msra.mxu0 0
  %1118 = vmatprep.subr.bf16.mxu0 0
  %1119 = vmatpush1.bf16.msra.mxu0 0
  %1120 = vmatprep.subr.bf16.mxu0 0
  %1121 = vmatpush1.bf16.msra.mxu0 0
  %1122 = vmatprep.subr.bf16.mxu0 0
  %1123 = vmatpush1.bf16.msra.mxu0 0
  %1124 = vmatprep.subr.bf16.mxu0 0
  %1125 = vmatpush1.bf16.msra.mxu0 0
  %1126 = vmatprep.subr.bf16.mxu0 0
  %1127 = vmatpush1.bf16.msra.mxu0 0
  %1128 = vmatprep.subr.bf16.mxu0 0
  %1129 = vmatpush1.bf16.msra.mxu0 0
  %1130 = vmatprep.subr.bf16.mxu0 0
  %1131 = vmatpush1.bf16.msra.mxu0 0
  %1132 = vmatprep.subr.bf16.mxu0 0
  %1133 = vmatpush1.bf16.msra.mxu0 0
  %1134 = vmatprep.subr.bf16.mxu0 0
  %1135 = vmatpush1.bf16.msra.mxu0 0
  %1136 = vmatprep.subr.bf16.mxu0 0
  %1137 = vmatpush1.bf16.msra.mxu0 0
  %1138 = vmatprep.mubr.bf16.mxu0 0
  %1139 = vmatmul.mubr.bf16.gmra.mrb[0].mxu0 %v1104
  %v1140 = vpop.f32.mrb[0].mxu0
  %v1141 = vadd.f32 0.0, %v1140
  %v1142 = vpop.f32.mrb[0].mxu0
  %v1143 = vpop.f32.mrb[0].mxu0
  %v1144 = vadd.f32 0.0, %v1143
  %v1145 = vpop.f32.mrb[0].mxu0
  %1146 = vdwg.mxu0
  %v1147 = vadd.f32 %v1088, %v1141
  %v1148 = vadd.f32 %v1089, %v1144
  %v1149 = vpack.c.bf16 %v916, %v915
  %v1150 = vld [vmem:[%s2 + $0x2e0] sm:$0xff]
  %v1151 = vld [vmem:[%s2 + $0x2e8] sm:$0xff]
  %v1152 = vld [vmem:[%s2 + $0x2f0] sm:$0xff]
  %v1153 = vld [vmem:[%s2 + $0x2f8] sm:$0xff]
  %v1154 = vld [vmem:[%s2 + $0x300] sm:$0xff]
  %v1155 = vld [vmem:[%s2 + $0x308] sm:$0xff]
  %v1156 = vld [vmem:[%s2 + $0x310] sm:$0xff]
  %v1157 = vld [vmem:[%s2 + $0x318] sm:$0xff]
  %v1158 = vpack.c.bf16 %v1151, %v1150
  %v1159 = vpack.c.bf16 %v1153, %v1152
  %v1160 = vpack.c.bf16 %v1155, %v1154
  %v1161 = vpack.c.bf16 %v1157, %v1156
  %v1163 = vsel %vm440, %v1149, 0
  %1165 = vmatprep.subr.bf16.mxu0 0
  %1166 = vmatpush1.bf16.msra.mxu0 %v1158
  %1167 = vmatprep.subr.bf16.mxu0 0
  %1168 = vmatpush1.bf16.msra.mxu0 %v1159
  %1169 = vmatprep.subr.bf16.mxu0 0
  %1170 = vmatpush1.bf16.msra.mxu0 %v1160
  %1171 = vmatprep.subr.bf16.mxu0 0
  %1172 = vmatpush1.bf16.msra.mxu0 %v1161
  %1173 = vmatprep.subr.bf16.mxu0 0
  %1174 = vmatpush1.bf16.msra.mxu0 0
  %1175 = vmatprep.subr.bf16.mxu0 0
  %1176 = vmatpush1.bf16.msra.mxu0 0
  %1177 = vmatprep.subr.bf16.mxu0 0
  %1178 = vmatpush1.bf16.msra.mxu0 0
  %1179 = vmatprep.subr.bf16.mxu0 0
  %1180 = vmatpush1.bf16.msra.mxu0 0
  %1181 = vmatprep.subr.bf16.mxu0 0
  %1182 = vmatpush1.bf16.msra.mxu0 0
  %1183 = vmatprep.subr.bf16.mxu0 0
  %1184 = vmatpush1.bf16.msra.mxu0 0
  %1185 = vmatprep.subr.bf16.mxu0 0
  %1186 = vmatpush1.bf16.msra.mxu0 0
  %1187 = vmatprep.subr.bf16.mxu0 0
  %1188 = vmatpush1.bf16.msra.mxu0 0
  %1189 = vmatprep.subr.bf16.mxu0 0
  %1190 = vmatpush1.bf16.msra.mxu0 0
  %1191 = vmatprep.subr.bf16.mxu0 0
  %1192 = vmatpush1.bf16.msra.mxu0 0
  %1193 = vmatprep.subr.bf16.mxu0 0
  %1194 = vmatpush1.bf16.msra.mxu0 0
  %1195 = vmatprep.subr.bf16.mxu0 0
  %1196 = vmatpush1.bf16.msra.mxu0 0
  %1197 = vmatprep.mubr.bf16.mxu0 0
  %1198 = vmatmul.mubr.bf16.gmra.mrb[0].mxu0 %v1163
  %v1199 = vpop.f32.mrb[0].mxu0
  %v1200 = vadd.f32 0.0, %v1199
  %v1201 = vpop.f32.mrb[0].mxu0
  %v1202 = vpop.f32.mrb[0].mxu0
  %v1203 = vadd.f32 0.0, %v1202
  %v1204 = vpop.f32.mrb[0].mxu0
  %1205 = vdwg.mxu0
  %v1206 = vadd.f32 %v1147, %v1200
  %v1207 = vadd.f32 %v1148, %v1203
  %v1208 = vld [vmem:[%s2 + $0x563] sm:$0x1]
  %v1209 = vlaneseq
  %v1210 = vshrl.u32 %v1209, 7
  %v1211 = vsub.s32 0, %v1210
  %v1212 = vrot.slane %v1208, %v1211
  %v1213 = vadd.f32 %v1206, %v1212
  %v1214 = vadd.f32 %v1207, %v1212
  %v1215 = vld [vmem:[%s2 + $0x4a0] sm:$0xff]
  %v1216 = vld [vmem:[%s2 + $0x4a8] sm:$0xff]
  %v1217 = vld [vmem:[%s2 + $0x4b0] sm:$0xff]
  %v1218 = vld [vmem:[%s2 + $0x4b8] sm:$0xff]
  %v1219 = vld [vmem:[%s2 + $0x4c0] sm:$0xff]
  %v1220 = vld [vmem:[%s2 + $0x4c8] sm:$0xff]
  %v1221 = vld [vmem:[%s2 + $0x4d0] sm:$0xff]
  %v1222 = vld [vmem:[%s2 + $0x4d8] sm:$0xff]
  %v1223 = vsel %vm440, %v1213, 0.0
  %v1224 = vsel %vm440, %v1214, 0.0
  %v1225 = vadd.f32 %v1223, %v1224
  %v1226 = vrot.slane %v1225, 4
  %v1227 = vadd.f32 %v1225, %v1226
  %v1228 = vrot.slane %v1227, 2
  %v1229 = vadd.f32 %v1227, %v1228
  %v1230 = vrot.slane %v1229, 1
  %v1231 = vadd.f32 %v1229, %v1230
  %v1233 = vsel %vm440, %v1231, 0
  %1235 = vmatprep.subr.mxu0 0.0
  %1236 = vmatpush1.msra.mxu0 %v1215
  %1237 = vmatprep.subr.mxu0 0.0
  %1238 = vmatpush1.msra.mxu0 %v1216
  %1239 = vmatprep.subr.mxu0 0.0
  %1240 = vmatpush1.msra.mxu0 %v1217
  %1241 = vmatprep.subr.mxu0 0.0
  %1242 = vmatpush1.msra.mxu0 %v1218
  %1243 = vmatprep.subr.mxu0 0.0
  %1244 = vmatpush1.msra.mxu0 %v1219
  %1245 = vmatprep.subr.mxu0 0.0
  %1246 = vmatpush1.msra.mxu0 %v1220
  %1247 = vmatprep.subr.mxu0 0.0
  %1248 = vmatpush1.msra.mxu0 %v1221
  %1249 = vmatprep.subr.mxu0 0.0
  %1250 = vmatpush1.msra.mxu0 %v1222
  %1251 = vmatprep.subr.mxu0 0.0
  %1252 = vmatpush1.msra.mxu0 0.0
  %1253 = vmatprep.subr.mxu0 0.0
  %1254 = vmatpush1.msra.mxu0 0.0
  %1255 = vmatprep.subr.mxu0 0.0
  %1256 = vmatpush1.msra.mxu0 0.0
  %1257 = vmatprep.subr.mxu0 0.0
  %1258 = vmatpush1.msra.mxu0 0.0
  %1259 = vmatprep.subr.mxu0 0.0
  %1260 = vmatpush1.msra.mxu0 0.0
  %1261 = vmatprep.subr.mxu0 0.0
  %1262 = vmatpush1.msra.mxu0 0.0
  %1263 = vmatprep.subr.mxu0 0.0
  %1264 = vmatpush1.msra.mxu0 0.0
  %1265 = vmatprep.subr.mxu0 0.0
  %1266 = vmatpush1.msra.mxu0 0.0
  %1267 = vmatprep.subr.mxu0 0.0
  %1268 = vmatpush1.msra.mxu0 0.0
  %1269 = vmatprep.subr.mxu0 0.0
  %1270 = vmatpush1.msra.mxu0 0.0
  %1271 = vmatprep.subr.mxu0 0.0
  %1272 = vmatpush1.msra.mxu0 0.0
  %1273 = vmatprep.subr.mxu0 0.0
  %1274 = vmatpush1.msra.mxu0 0.0
  %1275 = vmatprep.subr.mxu0 0.0
  %1276 = vmatpush1.msra.mxu0 0.0
  %1277 = vmatprep.subr.mxu0 0.0
  %1278 = vmatpush1.msra.mxu0 0.0
  %1279 = vmatprep.subr.mxu0 0.0
  %1280 = vmatpush1.msra.mxu0 0.0
  %1281 = vmatprep.subr.mxu0 0.0
  %1282 = vmatpush1.msra.mxu0 0.0
  %1283 = vmatprep.subr.mxu0 0.0
  %1284 = vmatpush1.msra.mxu0 0.0
  %1285 = vmatprep.subr.mxu0 0.0
  %1286 = vmatpush1.msra.mxu0 0.0
  %1287 = vmatprep.subr.mxu0 0.0
  %1288 = vmatpush1.msra.mxu0 0.0
  %1289 = vmatprep.subr.mxu0 0.0
  %1290 = vmatpush1.msra.mxu0 0.0
  %1291 = vmatprep.subr.mxu0 0.0
  %1292 = vmatpush1.msra.mxu0 0.0
  %1293 = vmatprep.subr.mxu0 0.0
  %1294 = vmatpush1.msra.mxu0 0.0
  %1295 = vmatprep.subr.mxu0 0.0
  %1296 = vmatpush1.msra.mxu0 0.0
  %1297 = vmatprep.subr.mxu0 0.0
  %1298 = vmatpush1.msra.mxu0 0.0
  %1299 = vmatprep.mubr.f32.mxu0 0.0
  %1300 = vmatmul.mubr.f32.gmra.mrb[0].mxu0 %v1233
  %v1301 = vpop.f32.mrb[0].mxu0
  %v1302 = vadd.f32 0.0, %v1301
  %v1303 = vpop.f32.mrb[0].mxu0
  %1304 = vdwg.mxu0
  %v1305 = vmul.f32 %v1213, %v1213
  %v1306 = vmul.f32 %v1214, %v1214
  %v1307 = vsel %vm440, %v1305, 0.0
  %v1308 = vsel %vm440, %v1306, 0.0
  %v1309 = vadd.f32 %v1307, %v1308
  %v1310 = vrot.slane %v1309, 4
  %v1311 = vadd.f32 %v1309, %v1310
  %v1312 = vrot.slane %v1311, 2
  %v1313 = vadd.f32 %v1311, %v1312
  %v1314 = vrot.slane %v1313, 1
  %v1315 = vadd.f32 %v1313, %v1314
  %v1317 = vsel %vm440, %v1315, 0
  %1319 = vmatprep.subr.mxu0 0.0
  %1320 = vmatpush1.msra.mxu0 %v1215
  %1321 = vmatprep.subr.mxu0 0.0
  %1322 = vmatpush1.msra.mxu0 %v1216
  %1323 = vmatprep.subr.mxu0 0.0
  %1324 = vmatpush1.msra.mxu0 %v1217
  %1325 = vmatprep.subr.mxu0 0.0
  %1326 = vmatpush1.msra.mxu0 %v1218
  %1327 = vmatprep.subr.mxu0 0.0
  %1328 = vmatpush1.msra.mxu0 %v1219
  %1329 = vmatprep.subr.mxu0 0.0
  %1330 = vmatpush1.msra.mxu0 %v1220
  %1331 = vmatprep.subr.mxu0 0.0
  %1332 = vmatpush1.msra.mxu0 %v1221
  %1333 = vmatprep.subr.mxu0 0.0
  %1334 = vmatpush1.msra.mxu0 %v1222
  %1335 = vmatprep.subr.mxu0 0.0
  %1336 = vmatpush1.msra.mxu0 0.0
  %1337 = vmatprep.subr.mxu0 0.0
  %1338 = vmatpush1.msra.mxu0 0.0
  %1339 = vmatprep.subr.mxu0 0.0
  %1340 = vmatpush1.msra.mxu0 0.0
  %1341 = vmatprep.subr.mxu0 0.0
  %1342 = vmatpush1.msra.mxu0 0.0
  %1343 = vmatprep.subr.mxu0 0.0
  %1344 = vmatpush1.msra.mxu0 0.0
  %1345 = vmatprep.subr.mxu0 0.0
  %1346 = vmatpush1.msra.mxu0 0.0
  %1347 = vmatprep.subr.mxu0 0.0
  %1348 = vmatpush1.msra.mxu0 0.0
  %1349 = vmatprep.subr.mxu0 0.0
  %1350 = vmatpush1.msra.mxu0 0.0
  %1351 = vmatprep.subr.mxu0 0.0
  %1352 = vmatpush1.msra.mxu0 0.0
  %1353 = vmatprep.subr.mxu0 0.0
  %1354 = vmatpush1.msra.mxu0 0.0
  %1355 = vmatprep.subr.mxu0 0.0
  %1356 = vmatpush1.msra.mxu0 0.0
  %1357 = vmatprep.subr.mxu0 0.0
  %1358 = vmatpush1.msra.mxu0 0.0
  %1359 = vmatprep.subr.mxu0 0.0
  %1360 = vmatpush1.msra.mxu0 0.0
  %1361 = vmatprep.subr.mxu0 0.0
  %1362 = vmatpush1.msra.mxu0 0.0
  %1363 = vmatprep.subr.mxu0 0.0
  %1364 = vmatpush1.msra.mxu0 0.0
  %1365 = vmatprep.subr.mxu0 0.0
  %1366 = vmatpush1.msra.mxu0 0.0
  %1367 = vmatprep.subr.mxu0 0.0
  %1368 = vmatpush1.msra.mxu0 0.0
  %1369 = vmatprep.subr.mxu0 0.0
  %1370 = vmatpush1.msra.mxu0 0.0
  %1371 = vmatprep.subr.mxu0 0.0
  %1372 = vmatpush1.msra.mxu0 0.0
  %1373 = vmatprep.subr.mxu0 0.0
  %1374 = vmatpush1.msra.mxu0 0.0
  %1375 = vmatprep.subr.mxu0 0.0
  %1376 = vmatpush1.msra.mxu0 0.0
  %1377 = vmatprep.subr.mxu0 0.0
  %1378 = vmatpush1.msra.mxu0 0.0
  %1379 = vmatprep.subr.mxu0 0.0
  %1380 = vmatpush1.msra.mxu0 0.0
  %1381 = vmatprep.subr.mxu0 0.0
  %1382 = vmatpush1.msra.mxu0 0.0
  %1383 = vmatprep.mubr.f32.mxu0 0.0
  %1384 = vmatmul.mubr.f32.gmra.mrb[0].mxu0 %v1317
  %v1385 = vpop.f32.mrb[0].mxu0
  %v1386 = vadd.f32 0.0, %v1385
  %v1387 = vpop.f32.mrb[0].mxu0
  %1388 = vdwg.mxu0
  %v1389 = vmul.f32 %v1302, %v1302
  %v1390 = vsub.f32 %v1386, %v1389
  %v1391 = vld [vmem:[%s2 + $0x564] sm:$0x1]
  %v1392 = vadd.f32 %v1390, 1e-05
  %v1393 = vrsqrt.pop %v1392
  %v1394 = vmul.f32 %v1391, %v1393
  %v1395 = vlaneseq
  %v1396 = vshrl.u32 %v1395, 7
  %v1397 = vsub.s32 0, %v1396
  %v1398 = vrot.slane %v1302, %v1397
  %v1399 = vsub.f32 %v1213, %v1398
  %v1400 = vsub.f32 %v1214, %v1398
  %v1401 = vlaneseq
  %v1402 = vshrl.u32 %v1401, 7
  %v1403 = vsub.s32 0, %v1402
  %v1404 = vrot.slane %v1394, %v1403
  %v1405 = vmul.f32 %v1399, %v1404
  %v1406 = vmul.f32 %v1400, %v1404
  %v1407 = vld [vmem:[%s2 + $0x565] sm:$0x1]
  %v1408 = vlaneseq
  %v1409 = vshrl.u32 %v1408, 7
  %v1410 = vsub.s32 0, %v1409
  %v1411 = vrot.slane %v1407, %v1410
  %v1412 = vadd.f32 %v1405, %v1411
  %v1413 = vadd.f32 %v1406, %v1411
  %v1414 = vmax.f32 %v1412, 0.0
  %v1415 = vmax.f32 %v1413, 0.0
  %v1418 = vcombine.high %v1414, %v1414
  %v1420 = vunpack.c.l.s4 1983009808
  %v1421 = vunpack.c.0.s8 %v1420
  %v1422 = vlaneseq
  %v1423 = vshrl.u32 %v1422, 7
  %v1424 = vsub.s32 %v1421, %v1423
  %v1425 = vrot.slane %v1414, %v1424
  %v1427 = vunpack.c.l.s4 1983009808
  %v1428 = vunpack.c.0.s8 %v1427
  %v1429 = vlaneseq
  %v1430 = vshrl.u32 %v1429, 7
  %v1431 = vsub.s32 %v1428, %v1430
  %v1432 = vrot.slane %v1418, %v1431
  %v1433 = vcombine.high %v1425, %v1425
  %v1434 = vcombine.high %v1432, %v1432
  %v1435 = vcombine.high %v1415, %v1415
  %v1437 = vunpack.c.l.s4 1983009808
  %v1438 = vunpack.c.0.s8 %v1437
  %v1439 = vlaneseq
  %v1440 = vshrl.u32 %v1439, 7
  %v1441 = vsub.s32 %v1438, %v1440
  %v1442 = vrot.slane %v1415, %v1441
  %v1444 = vunpack.c.l.s4 1983009808
  %v1445 = vunpack.c.0.s8 %v1444
  %v1446 = vlaneseq
  %v1447 = vshrl.u32 %v1446, 7
  %v1448 = vsub.s32 %v1445, %v1447
  %v1449 = vrot.slane %v1435, %v1448
  %v1450 = vcombine.high %v1442, %v1442
  %v1451 = vcombine.high %v1449, %v1449
  %1452 = vst.msk [vmem:[#allocation4] sm:$0x1] %vm724, 0.0
  %1453 = vst.msk [vmem:[#allocation4 + $0x8] sm:$0x1] %vm724, 0.0
  %1454 = vst.msk [vmem:[#allocation4 + $0x5] sm:$0x1] %vm724, 0.0
  %1455 = vst.msk [vmem:[#allocation4 + $0xd] sm:$0x1] %vm724, 0.0
  %v1456 = vlaneseq
  %v1457 = vshrl.u32 %v1456, 7
  %v1458 = vsub.s32 0, %v1457
  %v1459 = vrot.slane %v1425, %v1458
  %v1460 = vlaneseq
  %v1461 = vshrl.u32 %v1460, 7
  %v1462 = vsub.s32 0, %v1461
  %v1463 = vrot.slane %v1433, %v1462
  %v1464 = vlaneseq
  %v1465 = vshrl.u32 %v1464, 7
  %v1466 = vsub.s32 0, %v1465
  %v1467 = vrot.slane %v1432, %v1466
  %v1468 = vlaneseq
  %v1469 = vshrl.u32 %v1468, 7
  %v1470 = vsub.s32 0, %v1469
  %v1471 = vrot.slane %v1434, %v1470
  %v1472 = vlaneseq
  %v1473 = vshrl.u32 %v1472, 7
  %v1474 = vsub.s32 0, %v1473
  %v1475 = vrot.slane %v1442, %v1474
  %v1476 = vlaneseq
  %v1477 = vshrl.u32 %v1476, 7
  %v1478 = vsub.s32 0, %v1477
  %v1479 = vrot.slane %v1450, %v1478
  %v1480 = vlaneseq
  %v1481 = vshrl.u32 %v1480, 7
  %v1482 = vsub.s32 0, %v1481
  %v1483 = vrot.slane %v1449, %v1482
  %v1484 = vlaneseq
  %v1485 = vshrl.u32 %v1484, 7
  %v1486 = vsub.s32 0, %v1485
  %v1487 = vrot.slane %v1451, %v1486
  %v1488 = vsel %vm793, %v1463, %v1459
  %v1489 = vsel %vm795, %v1467, %v1488
  %v1490 = vsel %vm797, %v1471, %v1489
  %v1491 = vsel %vm793, %v1479, %v1475
  %v1492 = vsel %vm795, %v1483, %v1491
  %v1493 = vsel %vm797, %v1487, %v1492
  %vm1496 = vcmask 519168
  %1497 = vst.msk [vmem:[#allocation4 + $0x1] sm:$0xf] %vm1496, %v1490
  %1498 = vst.msk [vmem:[#allocation4 + $0x9] sm:$0xf] %vm1496, %v1493
  %1499 = vst.msk [vmem:[#allocation5] sm:$0x1] %vm724, 0.0
  %1500 = vst.msk [vmem:[#allocation5 + $0x8] sm:$0x1] %vm724, 0.0
  %1501 = vst.msk [vmem:[#allocation5 + $0x5] sm:$0x1] %vm724, 0.0
  %1502 = vst.msk [vmem:[#allocation5 + $0xd] sm:$0x1] %vm724, 0.0
  %v1503 = vlaneseq
  %v1504 = vshrl.u32 %v1503, 7
  %v1505 = vsub.s32 1, %v1504
  %v1506 = vrot.slane %v1425, %v1505
  %v1507 = vlaneseq
  %v1508 = vshrl.u32 %v1507, 7
  %v1509 = vsub.s32 1, %v1508
  %v1510 = vrot.slane %v1433, %v1509
  %v1511 = vlaneseq
  %v1512 = vshrl.u32 %v1511, 7
  %v1513 = vsub.s32 1, %v1512
  %v1514 = vrot.slane %v1432, %v1513
  %v1515 = vlaneseq
  %v1516 = vshrl.u32 %v1515, 7
  %v1517 = vsub.s32 1, %v1516
  %v1518 = vrot.slane %v1434, %v1517
  %v1519 = vlaneseq
  %v1520 = vshrl.u32 %v1519, 7
  %v1521 = vsub.s32 1, %v1520
  %v1522 = vrot.slane %v1442, %v1521
  %v1523 = vlaneseq
  %v1524 = vshrl.u32 %v1523, 7
  %v1525 = vsub.s32 1, %v1524
  %v1526 = vrot.slane %v1450, %v1525
  %v1527 = vlaneseq
  %v1528 = vshrl.u32 %v1527, 7
  %v1529 = vsub.s32 1, %v1528
  %v1530 = vrot.slane %v1449, %v1529
  %v1531 = vlaneseq
  %v1532 = vshrl.u32 %v1531, 7
  %v1533 = vsub.s32 1, %v1532
  %v1534 = vrot.slane %v1451, %v1533
  %v1535 = vsel %vm795, %v1510, %v1506
  %v1536 = vsel %vm797, %v1514, %v1535
  %v1537 = vsel %vm799, %v1518, %v1536
  %v1538 = vsel %vm795, %v1526, %v1522
  %v1539 = vsel %vm797, %v1530, %v1538
  %v1540 = vsel %vm799, %v1534, %v1539
  %vm1543 = vcmask 520193
  %1544 = vst.msk [vmem:[#allocation5] sm:$0x1e] %vm1543, %v1537
  %1545 = vst.msk [vmem:[#allocation5 + $0x8] sm:$0x1e] %vm1543, %v1540
  %v1546 = vld [vmem:[#allocation4] sm:$0xf]
  %v1547 = vld [vmem:[#allocation4 + $0x8] sm:$0xf]
  %v1548 = vld [vmem:[#allocation5] sm:$0xf]
  %v1549 = vld [vmem:[#allocation5 + $0x8] sm:$0xf]
  %v1550 = vld [vmem:[#allocation4 + $0x1] sm:$0xf]
  %v1551 = vld [vmem:[#allocation4 + $0x9] sm:$0xf]
  %v1552 = vld [vmem:[#allocation5 + $0x1] sm:$0xf]
  %v1553 = vld [vmem:[#allocation5 + $0x9] sm:$0xf]
  %v1554 = vld [vmem:[#allocation4 + $0x2] sm:$0xf]
  %v1555 = vld [vmem:[#allocation4 + $0xa] sm:$0xf]
  %v1558 = vcombine.low %v1546, %v1547
  %v1560 = vpack.c.bf16 %v1558, %v1558
  %v1561 = vld [vmem:[%s2 + $0x320] sm:$0xff]
  %v1562 = vld [vmem:[%s2 + $0x328] sm:$0xff]
  %v1563 = vld [vmem:[%s2 + $0x330] sm:$0xff]
  %v1564 = vld [vmem:[%s2 + $0x338] sm:$0xff]
  %v1565 = vld [vmem:[%s2 + $0x340] sm:$0xff]
  %v1566 = vld [vmem:[%s2 + $0x348] sm:$0xff]
  %v1567 = vld [vmem:[%s2 + $0x350] sm:$0xff]
  %v1568 = vld [vmem:[%s2 + $0x358] sm:$0xff]
  %v1569 = vpack.c.bf16 %v1562, %v1561
  %v1570 = vpack.c.bf16 %v1564, %v1563
  %v1571 = vpack.c.bf16 %v1566, %v1565
  %v1572 = vpack.c.bf16 %v1568, %v1567
  %v1575 = vcombine.low %v1548, %v1549
  %v1577 = vpack.c.bf16 %v1575, %v1575
  %v1578 = vld [vmem:[%s2 + $0x360] sm:$0xff]
  %v1579 = vld [vmem:[%s2 + $0x368] sm:$0xff]
  %v1580 = vld [vmem:[%s2 + $0x370] sm:$0xff]
  %v1581 = vld [vmem:[%s2 + $0x378] sm:$0xff]
  %v1582 = vld [vmem:[%s2 + $0x380] sm:$0xff]
  %v1583 = vld [vmem:[%s2 + $0x388] sm:$0xff]
  %v1584 = vld [vmem:[%s2 + $0x390] sm:$0xff]
  %v1585 = vld [vmem:[%s2 + $0x398] sm:$0xff]
  %v1586 = vpack.c.bf16 %v1579, %v1578
  %v1587 = vpack.c.bf16 %v1581, %v1580
  %v1588 = vpack.c.bf16 %v1583, %v1582
  %v1589 = vpack.c.bf16 %v1585, %v1584
  %v1591 = vsel %vm440, %v1577, 0
  %1593 = vmatprep.subr.bf16.mxu0 0
  %1594 = vmatpush1.bf16.msra.mxu0 %v1586
  %1595 = vmatprep.subr.bf16.mxu0 0
  %1596 = vmatpush1.bf16.msra.mxu0 %v1587
  %1597 = vmatprep.subr.bf16.mxu0 0
  %1598 = vmatpush1.bf16.msra.mxu0 %v1588
  %1599 = vmatprep.subr.bf16.mxu0 0
  %1600 = vmatpush1.bf16.msra.mxu0 %v1589
  %1601 = vmatprep.subr.bf16.mxu0 0
  %1602 = vmatpush1.bf16.msra.mxu0 0
  %1603 = vmatprep.subr.bf16.mxu0 0
  %1604 = vmatpush1.bf16.msra.mxu0 0
  %1605 = vmatprep.subr.bf16.mxu0 0
  %1606 = vmatpush1.bf16.msra.mxu0 0
  %1607 = vmatprep.subr.bf16.mxu0 0
  %1608 = vmatpush1.bf16.msra.mxu0 0
  %1609 = vmatprep.subr.bf16.mxu0 0
  %1610 = vmatpush1.bf16.msra.mxu0 0
  %1611 = vmatprep.subr.bf16.mxu0 0
  %1612 = vmatpush1.bf16.msra.mxu0 0
  %1613 = vmatprep.subr.bf16.mxu0 0
  %1614 = vmatpush1.bf16.msra.mxu0 0
  %1615 = vmatprep.subr.bf16.mxu0 0
  %1616 = vmatpush1.bf16.msra.mxu0 0
  %1617 = vmatprep.subr.bf16.mxu0 0
  %1618 = vmatpush1.bf16.msra.mxu0 0
  %1619 = vmatprep.subr.bf16.mxu0 0
  %1620 = vmatpush1.bf16.msra.mxu0 0
  %1621 = vmatprep.subr.bf16.mxu0 0
  %1622 = vmatpush1.bf16.msra.mxu0 0
  %1623 = vmatprep.subr.bf16.mxu0 0
  %1624 = vmatpush1.bf16.msra.mxu0 0
  %1625 = vmatprep.mubr.bf16.mxu0 0
  %1626 = vmatmul.mubr.bf16.gmra.mrb[0].mxu0 %v1591
  %v1627 = vpop.f32.mrb[0].mxu0
  %v1628 = vadd.f32 0.0, %v1627
  %v1629 = vpop.f32.mrb[0].mxu0
  %v1630 = vpop.f32.mrb[0].mxu0
  %v1631 = vpop.f32.mrb[0].mxu0
  %1632 = vdwg.mxu0
  %v1634 = vsel %vm440, %v1560, 0
  %1636 = vmatprep.subr.bf16.mxu0 0
  %1637 = vmatpush1.bf16.msra.mxu0 %v1569
  %1638 = vmatprep.subr.bf16.mxu0 0
  %1639 = vmatpush1.bf16.msra.mxu0 %v1570
  %1640 = vmatprep.subr.bf16.mxu0 0
  %1641 = vmatpush1.bf16.msra.mxu0 %v1571
  %1642 = vmatprep.subr.bf16.mxu0 0
  %1643 = vmatpush1.bf16.msra.mxu0 %v1572
  %1644 = vmatprep.subr.bf16.mxu0 0
  %1645 = vmatpush1.bf16.msra.mxu0 0
  %1646 = vmatprep.subr.bf16.mxu0 0
  %1647 = vmatpush1.bf16.msra.mxu0 0
  %1648 = vmatprep.subr.bf16.mxu0 0
  %1649 = vmatpush1.bf16.msra.mxu0 0
  %1650 = vmatprep.subr.bf16.mxu0 0
  %1651 = vmatpush1.bf16.msra.mxu0 0
  %1652 = vmatprep.subr.bf16.mxu0 0
  %1653 = vmatpush1.bf16.msra.mxu0 0
  %1654 = vmatprep.subr.bf16.mxu0 0
  %1655 = vmatpush1.bf16.msra.mxu0 0
  %1656 = vmatprep.subr.bf16.mxu0 0
  %1657 = vmatpush1.bf16.msra.mxu0 0
  %1658 = vmatprep.subr.bf16.mxu0 0
  %1659 = vmatpush1.bf16.msra.mxu0 0
  %1660 = vmatprep.subr.bf16.mxu0 0
  %1661 = vmatpush1.bf16.msra.mxu0 0
  %1662 = vmatprep.subr.bf16.mxu0 0
  %1663 = vmatpush1.bf16.msra.mxu0 0
  %1664 = vmatprep.subr.bf16.mxu0 0
  %1665 = vmatpush1.bf16.msra.mxu0 0
  %1666 = vmatprep.subr.bf16.mxu0 0
  %1667 = vmatpush1.bf16.msra.mxu0 0
  %1668 = vmatprep.mubr.bf16.mxu0 0
  %1669 = vmatmul.mubr.bf16.gmra.mrb[0].mxu0 %v1634
  %v1670 = vpop.f32.mrb[0].mxu0
  %v1671 = vadd.f32 %v1628, %v1670
  %v1672 = vpop.f32.mrb[0].mxu0
  %v1673 = vpop.f32.mrb[0].mxu0
  %v1674 = vpop.f32.mrb[0].mxu0
  %1675 = vdwg.mxu0
  %v1678 = vcombine.low %v1550, %v1551
  %v1680 = vpack.c.bf16 %v1678, %v1678
  %v1681 = vld [vmem:[%s2 + $0x3a0] sm:$0xff]
  %v1682 = vld [vmem:[%s2 + $0x3a8] sm:$0xff]
  %v1683 = vld [vmem:[%s2 + $0x3b0] sm:$0xff]
  %v1684 = vld [vmem:[%s2 + $0x3b8] sm:$0xff]
  %v1685 = vld [vmem:[%s2 + $0x3c0] sm:$0xff]
  %v1686 = vld [vmem:[%s2 + $0x3c8] sm:$0xff]
  %v1687 = vld [vmem:[%s2 + $0x3d0] sm:$0xff]
  %v1688 = vld [vmem:[%s2 + $0x3d8] sm:$0xff]
  %v1689 = vpack.c.bf16 %v1682, %v1681
  %v1690 = vpack.c.bf16 %v1684, %v1683
  %v1691 = vpack.c.bf16 %v1686, %v1685
  %v1692 = vpack.c.bf16 %v1688, %v1687
  %v1694 = vsel %vm440, %v1680, 0
  %1696 = vmatprep.subr.bf16.mxu0 0
  %1697 = vmatpush1.bf16.msra.mxu0 %v1689
  %1698 = vmatprep.subr.bf16.mxu0 0
  %1699 = vmatpush1.bf16.msra.mxu0 %v1690
  %1700 = vmatprep.subr.bf16.mxu0 0
  %1701 = vmatpush1.bf16.msra.mxu0 %v1691
  %1702 = vmatprep.subr.bf16.mxu0 0
  %1703 = vmatpush1.bf16.msra.mxu0 %v1692
  %1704 = vmatprep.subr.bf16.mxu0 0
  %1705 = vmatpush1.bf16.msra.mxu0 0
  %1706 = vmatprep.subr.bf16.mxu0 0
  %1707 = vmatpush1.bf16.msra.mxu0 0
  %1708 = vmatprep.subr.bf16.mxu0 0
  %1709 = vmatpush1.bf16.msra.mxu0 0
  %1710 = vmatprep.subr.bf16.mxu0 0
  %1711 = vmatpush1.bf16.msra.mxu0 0
  %1712 = vmatprep.subr.bf16.mxu0 0
  %1713 = vmatpush1.bf16.msra.mxu0 0
  %1714 = vmatprep.subr.bf16.mxu0 0
  %1715 = vmatpush1.bf16.msra.mxu0 0
  %1716 = vmatprep.subr.bf16.mxu0 0
  %1717 = vmatpush1.bf16.msra.mxu0 0
  %1718 = vmatprep.subr.bf16.mxu0 0
  %1719 = vmatpush1.bf16.msra.mxu0 0
  %1720 = vmatprep.subr.bf16.mxu0 0
  %1721 = vmatpush1.bf16.msra.mxu0 0
  %1722 = vmatprep.subr.bf16.mxu0 0
  %1723 = vmatpush1.bf16.msra.mxu0 0
  %1724 = vmatprep.subr.bf16.mxu0 0
  %1725 = vmatpush1.bf16.msra.mxu0 0
  %1726 = vmatprep.subr.bf16.mxu0 0
  %1727 = vmatpush1.bf16.msra.mxu0 0
  %1728 = vmatprep.mubr.bf16.mxu0 0
  %1729 = vmatmul.mubr.bf16.gmra.mrb[0].mxu0 %v1694
  %v1730 = vpop.f32.mrb[0].mxu0
  %v1731 = vadd.f32 0.0, %v1730
  %v1732 = vpop.f32.mrb[0].mxu0
  %v1733 = vpop.f32.mrb[0].mxu0
  %v1734 = vpop.f32.mrb[0].mxu0
  %1735 = vdwg.mxu0
  %v1736 = vadd.f32 %v1671, %v1731
  %v1739 = vcombine.low %v1552, %v1553
  %v1741 = vpack.c.bf16 %v1739, %v1739
  %v1742 = vld [vmem:[%s2 + $0x3e0] sm:$0xff]
  %v1743 = vld [vmem:[%s2 + $0x3e8] sm:$0xff]
  %v1744 = vld [vmem:[%s2 + $0x3f0] sm:$0xff]
  %v1745 = vld [vmem:[%s2 + $0x3f8] sm:$0xff]
  %v1746 = vld [vmem:[%s2 + $0x400] sm:$0xff]
  %v1747 = vld [vmem:[%s2 + $0x408] sm:$0xff]
  %v1748 = vld [vmem:[%s2 + $0x410] sm:$0xff]
  %v1749 = vld [vmem:[%s2 + $0x418] sm:$0xff]
  %v1750 = vpack.c.bf16 %v1743, %v1742
  %v1751 = vpack.c.bf16 %v1745, %v1744
  %v1752 = vpack.c.bf16 %v1747, %v1746
  %v1753 = vpack.c.bf16 %v1749, %v1748
  %v1755 = vsel %vm440, %v1741, 0
  %1757 = vmatprep.subr.bf16.mxu0 0
  %1758 = vmatpush1.bf16.msra.mxu0 %v1750
  %1759 = vmatprep.subr.bf16.mxu0 0
  %1760 = vmatpush1.bf16.msra.mxu0 %v1751
  %1761 = vmatprep.subr.bf16.mxu0 0
  %1762 = vmatpush1.bf16.msra.mxu0 %v1752
  %1763 = vmatprep.subr.bf16.mxu0 0
  %1764 = vmatpush1.bf16.msra.mxu0 %v1753
  %1765 = vmatprep.subr.bf16.mxu0 0
  %1766 = vmatpush1.bf16.msra.mxu0 0
  %1767 = vmatprep.subr.bf16.mxu0 0
  %1768 = vmatpush1.bf16.msra.mxu0 0
  %1769 = vmatprep.subr.bf16.mxu0 0
  %1770 = vmatpush1.bf16.msra.mxu0 0
  %1771 = vmatprep.subr.bf16.mxu0 0
  %1772 = vmatpush1.bf16.msra.mxu0 0
  %1773 = vmatprep.subr.bf16.mxu0 0
  %1774 = vmatpush1.bf16.msra.mxu0 0
  %1775 = vmatprep.subr.bf16.mxu0 0
  %1776 = vmatpush1.bf16.msra.mxu0 0
  %1777 = vmatprep.subr.bf16.mxu0 0
  %1778 = vmatpush1.bf16.msra.mxu0 0
  %1779 = vmatprep.subr.bf16.mxu0 0
  %1780 = vmatpush1.bf16.msra.mxu0 0
  %1781 = vmatprep.subr.bf16.mxu0 0
  %1782 = vmatpush1.bf16.msra.mxu0 0
  %1783 = vmatprep.subr.bf16.mxu0 0
  %1784 = vmatpush1.bf16.msra.mxu0 0
  %1785 = vmatprep.subr.bf16.mxu0 0
  %1786 = vmatpush1.bf16.msra.mxu0 0
  %1787 = vmatprep.subr.bf16.mxu0 0
  %1788 = vmatpush1.bf16.msra.mxu0 0
  %1789 = vmatprep.mubr.bf16.mxu0 0
  %1790 = vmatmul.mubr.bf16.gmra.mrb[0].mxu0 %v1755
  %v1791 = vpop.f32.mrb[0].mxu0
  %v1792 = vadd.f32 0.0, %v1791
  %v1793 = vpop.f32.mrb[0].mxu0
  %v1794 = vpop.f32.mrb[0].mxu0
  %v1795 = vpop.f32.mrb[0].mxu0
  %1796 = vdwg.mxu0
  %v1797 = vadd.f32 %v1736, %v1792
  %v1800 = vcombine.low %v1554, %v1555
  %v1802 = vpack.c.bf16 %v1800, %v1800
  %v1803 = vld [vmem:[%s2 + $0x420] sm:$0xff]
  %v1804 = vld [vmem:[%s2 + $0x428] sm:$0xff]
  %v1805 = vld [vmem:[%s2 + $0x430] sm:$0xff]
  %v1806 = vld [vmem:[%s2 + $0x438] sm:$0xff]
  %v1807 = vld [vmem:[%s2 + $0x440] sm:$0xff]
  %v1808 = vld [vmem:[%s2 + $0x448] sm:$0xff]
  %v1809 = vld [vmem:[%s2 + $0x450] sm:$0xff]
  %v1810 = vld [vmem:[%s2 + $0x458] sm:$0xff]
  %v1811 = vpack.c.bf16 %v1804, %v1803
  %v1812 = vpack.c.bf16 %v1806, %v1805
  %v1813 = vpack.c.bf16 %v1808, %v1807
  %v1814 = vpack.c.bf16 %v1810, %v1809
  %v1816 = vsel %vm440, %v1802, 0
  %1818 = vmatprep.subr.bf16.mxu0 0
  %1819 = vmatpush1.bf16.msra.mxu0 %v1811
  %1820 = vmatprep.subr.bf16.mxu0 0
  %1821 = vmatpush1.bf16.msra.mxu0 %v1812
  %1822 = vmatprep.subr.bf16.mxu0 0
  %1823 = vmatpush1.bf16.msra.mxu0 %v1813
  %1824 = vmatprep.subr.bf16.mxu0 0
  %1825 = vmatpush1.bf16.msra.mxu0 %v1814
  %1826 = vmatprep.subr.bf16.mxu0 0
  %1827 = vmatpush1.bf16.msra.mxu0 0
  %1828 = vmatprep.subr.bf16.mxu0 0
  %1829 = vmatpush1.bf16.msra.mxu0 0
  %1830 = vmatprep.subr.bf16.mxu0 0
  %1831 = vmatpush1.bf16.msra.mxu0 0
  %1832 = vmatprep.subr.bf16.mxu0 0
  %1833 = vmatpush1.bf16.msra.mxu0 0
  %1834 = vmatprep.subr.bf16.mxu0 0
  %1835 = vmatpush1.bf16.msra.mxu0 0
  %1836 = vmatprep.subr.bf16.mxu0 0
  %1837 = vmatpush1.bf16.msra.mxu0 0
  %1838 = vmatprep.subr.bf16.mxu0 0
  %1839 = vmatpush1.bf16.msra.mxu0 0
  %1840 = vmatprep.subr.bf16.mxu0 0
  %1841 = vmatpush1.bf16.msra.mxu0 0
  %1842 = vmatprep.subr.bf16.mxu0 0
  %1843 = vmatpush1.bf16.msra.mxu0 0
  %1844 = vmatprep.subr.bf16.mxu0 0
  %1845 = vmatpush1.bf16.msra.mxu0 0
  %1846 = vmatprep.subr.bf16.mxu0 0
  %1847 = vmatpush1.bf16.msra.mxu0 0
  %1848 = vmatprep.subr.bf16.mxu0 0
  %1849 = vmatpush1.bf16.msra.mxu0 0
  %1850 = vmatprep.mubr.bf16.mxu0 0
  %1851 = vmatmul.mubr.bf16.gmra.mrb[0].mxu0 %v1816
  %v1852 = vpop.f32.mrb[0].mxu0
  %v1853 = vadd.f32 0.0, %v1852
  %v1854 = vpop.f32.mrb[0].mxu0
  %v1855 = vpop.f32.mrb[0].mxu0
  %v1856 = vpop.f32.mrb[0].mxu0
  %1857 = vdwg.mxu0
  %v1858 = vadd.f32 %v1797, %v1853
  %v1859 = vld [vmem:[%s2 + $0x566] sm:$0x1]
  %v1860 = vlaneseq
  %v1861 = vshrl.u32 %v1860, 7
  %v1862 = vsub.s32 0, %v1861
  %v1863 = vrot.slane %v1859, %v1862
  %v1864 = vadd.f32 %v1858, %v1863
  %v1865 = vld [vmem:[%s2 + $0x4e0] sm:$0xff]
  %v1866 = vld [vmem:[%s2 + $0x4e8] sm:$0xff]
  %v1867 = vld [vmem:[%s2 + $0x4f0] sm:$0xff]
  %v1868 = vld [vmem:[%s2 + $0x4f8] sm:$0xff]
  %v1869 = vld [vmem:[%s2 + $0x500] sm:$0xff]
  %v1870 = vld [vmem:[%s2 + $0x508] sm:$0xff]
  %v1871 = vld [vmem:[%s2 + $0x510] sm:$0xff]
  %v1872 = vld [vmem:[%s2 + $0x518] sm:$0xff]
  %v1873 = vsel %vm440, %v1864, 0.0
  %v1874 = vrot.slane %v1873, 4
  %v1875 = vadd.f32 %v1873, %v1874
  %v1876 = vrot.slane %v1875, 2
  %v1877 = vadd.f32 %v1875, %v1876
  %v1878 = vrot.slane %v1877, 1
  %v1879 = vadd.f32 %v1877, %v1878
  %v1881 = vsel %vm440, %v1879, 0
  %1883 = vmatprep.subr.mxu0 0.0
  %1884 = vmatpush1.msra.mxu0 %v1865
  %1885 = vmatprep.subr.mxu0 0.0
  %1886 = vmatpush1.msra.mxu0 %v1866
  %1887 = vmatprep.subr.mxu0 0.0
  %1888 = vmatpush1.msra.mxu0 %v1867
  %1889 = vmatprep.subr.mxu0 0.0
  %1890 = vmatpush1.msra.mxu0 %v1868
  %1891 = vmatprep.subr.mxu0 0.0
  %1892 = vmatpush1.msra.mxu0 %v1869
  %1893 = vmatprep.subr.mxu0 0.0
  %1894 = vmatpush1.msra.mxu0 %v1870
  %1895 = vmatprep.subr.mxu0 0.0
  %1896 = vmatpush1.msra.mxu0 %v1871
  %1897 = vmatprep.subr.mxu0 0.0
  %1898 = vmatpush1.msra.mxu0 %v1872
  %1899 = vmatprep.subr.mxu0 0.0
  %1900 = vmatpush1.msra.mxu0 0.0
  %1901 = vmatprep.subr.mxu0 0.0
  %1902 = vmatpush1.msra.mxu0 0.0
  %1903 = vmatprep.subr.mxu0 0.0
  %1904 = vmatpush1.msra.mxu0 0.0
  %1905 = vmatprep.subr.mxu0 0.0
  %1906 = vmatpush1.msra.mxu0 0.0
  %1907 = vmatprep.subr.mxu0 0.0
  %1908 = vmatpush1.msra.mxu0 0.0
  %1909 = vmatprep.subr.mxu0 0.0
  %1910 = vmatpush1.msra.mxu0 0.0
  %1911 = vmatprep.subr.mxu0 0.0
  %1912 = vmatpush1.msra.mxu0 0.0
  %1913 = vmatprep.subr.mxu0 0.0
  %1914 = vmatpush1.msra.mxu0 0.0
  %1915 = vmatprep.subr.mxu0 0.0
  %1916 = vmatpush1.msra.mxu0 0.0
  %1917 = vmatprep.subr.mxu0 0.0
  %1918 = vmatpush1.msra.mxu0 0.0
  %1919 = vmatprep.subr.mxu0 0.0
  %1920 = vmatpush1.msra.mxu0 0.0
  %1921 = vmatprep.subr.mxu0 0.0
  %1922 = vmatpush1.msra.mxu0 0.0
  %1923 = vmatprep.subr.mxu0 0.0
  %1924 = vmatpush1.msra.mxu0 0.0
  %1925 = vmatprep.subr.mxu0 0.0
  %1926 = vmatpush1.msra.mxu0 0.0
  %1927 = vmatprep.subr.mxu0 0.0
  %1928 = vmatpush1.msra.mxu0 0.0
  %1929 = vmatprep.subr.mxu0 0.0
  %1930 = vmatpush1.msra.mxu0 0.0
  %1931 = vmatprep.subr.mxu0 0.0
  %1932 = vmatpush1.msra.mxu0 0.0
  %1933 = vmatprep.subr.mxu0 0.0
  %1934 = vmatpush1.msra.mxu0 0.0
  %1935 = vmatprep.subr.mxu0 0.0
  %1936 = vmatpush1.msra.mxu0 0.0
  %1937 = vmatprep.subr.mxu0 0.0
  %1938 = vmatpush1.msra.mxu0 0.0
  %1939 = vmatprep.subr.mxu0 0.0
  %1940 = vmatpush1.msra.mxu0 0.0
  %1941 = vmatprep.subr.mxu0 0.0
  %1942 = vmatpush1.msra.mxu0 0.0
  %1943 = vmatprep.subr.mxu0 0.0
  %1944 = vmatpush1.msra.mxu0 0.0
  %1945 = vmatprep.subr.mxu0 0.0
  %1946 = vmatpush1.msra.mxu0 0.0
  %1947 = vmatprep.mubr.f32.mxu0 0.0
  %1948 = vmatmul.mubr.f32.gmra.mrb[0].mxu0 %v1881
  %v1949 = vpop.f32.mrb[0].mxu0
  %v1950 = vadd.f32 0.0, %v1949
  %v1951 = vpop.f32.mrb[0].mxu0
  %1952 = vdwg.mxu0
  %v1953 = vmul.f32 %v1864, %v1864
  %v1954 = vsel %vm440, %v1953, 0.0
  %v1955 = vrot.slane %v1954, 4
  %v1956 = vadd.f32 %v1954, %v1955
  %v1957 = vrot.slane %v1956, 2
  %v1958 = vadd.f32 %v1956, %v1957
  %v1959 = vrot.slane %v1958, 1
  %v1960 = vadd.f32 %v1958, %v1959
  %v1962 = vsel %vm440, %v1960, 0
  %1964 = vmatprep.subr.mxu0 0.0
  %1965 = vmatpush1.msra.mxu0 %v1865
  %1966 = vmatprep.subr.mxu0 0.0
  %1967 = vmatpush1.msra.mxu0 %v1866
  %1968 = vmatprep.subr.mxu0 0.0
  %1969 = vmatpush1.msra.mxu0 %v1867
  %1970 = vmatprep.subr.mxu0 0.0
  %1971 = vmatpush1.msra.mxu0 %v1868
  %1972 = vmatprep.subr.mxu0 0.0
  %1973 = vmatpush1.msra.mxu0 %v1869
  %1974 = vmatprep.subr.mxu0 0.0
  %1975 = vmatpush1.msra.mxu0 %v1870
  %1976 = vmatprep.subr.mxu0 0.0
  %1977 = vmatpush1.msra.mxu0 %v1871
  %1978 = vmatprep.subr.mxu0 0.0
  %1979 = vmatpush1.msra.mxu0 %v1872
  %1980 = vmatprep.subr.mxu0 0.0
  %1981 = vmatpush1.msra.mxu0 0.0
  %1982 = vmatprep.subr.mxu0 0.0
  %1983 = vmatpush1.msra.mxu0 0.0
  %1984 = vmatprep.subr.mxu0 0.0
  %1985 = vmatpush1.msra.mxu0 0.0
  %1986 = vmatprep.subr.mxu0 0.0
  %1987 = vmatpush1.msra.mxu0 0.0
  %1988 = vmatprep.subr.mxu0 0.0
  %1989 = vmatpush1.msra.mxu0 0.0
  %1990 = vmatprep.subr.mxu0 0.0
  %1991 = vmatpush1.msra.mxu0 0.0
  %1992 = vmatprep.subr.mxu0 0.0
  %1993 = vmatpush1.msra.mxu0 0.0
  %1994 = vmatprep.subr.mxu0 0.0
  %1995 = vmatpush1.msra.mxu0 0.0
  %1996 = vmatprep.subr.mxu0 0.0
  %1997 = vmatpush1.msra.mxu0 0.0
  %1998 = vmatprep.subr.mxu0 0.0
  %1999 = vmatpush1.msra.mxu0 0.0
  %2000 = vmatprep.subr.mxu0 0.0
  %2001 = vmatpush1.msra.mxu0 0.0
  %2002 = vmatprep.subr.mxu0 0.0
  %2003 = vmatpush1.msra.mxu0 0.0
  %2004 = vmatprep.subr.mxu0 0.0
  %2005 = vmatpush1.msra.mxu0 0.0
  %2006 = vmatprep.subr.mxu0 0.0
  %2007 = vmatpush1.msra.mxu0 0.0
  %2008 = vmatprep.subr.mxu0 0.0
  %2009 = vmatpush1.msra.mxu0 0.0
  %2010 = vmatprep.subr.mxu0 0.0
  %2011 = vmatpush1.msra.mxu0 0.0
  %2012 = vmatprep.subr.mxu0 0.0
  %2013 = vmatpush1.msra.mxu0 0.0
  %2014 = vmatprep.subr.mxu0 0.0
  %2015 = vmatpush1.msra.mxu0 0.0
  %2016 = vmatprep.subr.mxu0 0.0
  %2017 = vmatpush1.msra.mxu0 0.0
  %2018 = vmatprep.subr.mxu0 0.0
  %2019 = vmatpush1.msra.mxu0 0.0
  %2020 = vmatprep.subr.mxu0 0.0
  %2021 = vmatpush1.msra.mxu0 0.0
  %2022 = vmatprep.subr.mxu0 0.0
  %2023 = vmatpush1.msra.mxu0 0.0
  %2024 = vmatprep.subr.mxu0 0.0
  %2025 = vmatpush1.msra.mxu0 0.0
  %2026 = vmatprep.subr.mxu0 0.0
  %2027 = vmatpush1.msra.mxu0 0.0
  %2028 = vmatprep.mubr.f32.mxu0 0.0
  %2029 = vmatmul.mubr.f32.gmra.mrb[0].mxu0 %v1962
  %v2030 = vpop.f32.mrb[0].mxu0
  %v2031 = vadd.f32 0.0, %v2030
  %v2032 = vpop.f32.mrb[0].mxu0
  %2033 = vdwg.mxu0
  %v2034 = vmul.f32 %v1950, %v1950
  %v2035 = vsub.f32 %v2031, %v2034
  %v2036 = vld [vmem:[%s2 + $0x567] sm:$0x1]
  %v2037 = vadd.f32 %v2035, 1e-05
  %v2038 = vrsqrt.pop %v2037
  %v2039 = vmul.f32 %v2036, %v2038
  %v2040 = vlaneseq
  %v2041 = vshrl.u32 %v2040, 7
  %v2042 = vsub.s32 0, %v2041
  %v2043 = vrot.slane %v1950, %v2042
  %v2044 = vsub.f32 %v1864, %v2043
  %v2045 = vlaneseq
  %v2046 = vshrl.u32 %v2045, 7
  %v2047 = vsub.s32 0, %v2046
  %v2048 = vrot.slane %v2039, %v2047
  %v2049 = vmul.f32 %v2044, %v2048
  %v2050 = vld [vmem:[%s2 + $0x568] sm:$0x1]
  %v2051 = vlaneseq
  %v2052 = vshrl.u32 %v2051, 7
  %v2053 = vsub.s32 0, %v2052
  %v2054 = vrot.slane %v2050, %v2053
  %v2055 = vadd.f32 %v2049, %v2054
  %v2056 = vmax.f32 %v2055, 0.0
  %v2058 = vcombine.high %v2056, %v2056
  %v2060 = vrot.slane %v2056, 5
  %v2061 = vrot.slane %v2060, 4
  %v2062 = vrot.slane %v2058, 5
  %v2063 = vrot.slane %v2062, 4
  %v2066 = vadd.f32 %v2056, %v2061
  %v2067 = vadd.f32 %v2058, %v2063
  %v2068 = vrot.slane %v2056, 6
  %v2069 = vrot.slane %v2068, 4
  %v2070 = vrot.slane %v2058, 6
  %v2071 = vrot.slane %v2070, 4
  %v2074 = vadd.f32 %v2066, %v2069
  %v2075 = vadd.f32 %v2067, %v2071
  %v2076 = vrot.slane %v2056, 7
  %v2077 = vrot.slane %v2076, 4
  %v2078 = vrot.slane %v2058, 7
  %v2079 = vrot.slane %v2078, 4
  %v2082 = vadd.f32 %v2074, %v2077
  %v2083 = vadd.f32 %v2075, %v2079
  %v2084 = vld [vmem:[%s2 + $0x520] sm:$0xff]
  %v2085 = vld [vmem:[%s2 + $0x528] sm:$0xff]
  %v2086 = vld [vmem:[%s2 + $0x530] sm:$0xff]
  %v2087 = vld [vmem:[%s2 + $0x538] sm:$0xff]
  %v2088 = vld [vmem:[%s2 + $0x540] sm:$0xff]
  %v2089 = vld [vmem:[%s2 + $0x548] sm:$0xff]
  %v2090 = vld [vmem:[%s2 + $0x550] sm:$0xff]
  %v2091 = vld [vmem:[%s2 + $0x558] sm:$0xff]
  %v2092 = vld [vmem:[%s2 + $0x569] sm:$0x1]
  %v2093 = vlaneseq
  %v2094 = vshrl.u32 %v2093, 7
  %v2095 = vsub.s32 0, %v2094
  %v2096 = vrot.slane %v2092, %v2095
  %v2099 = vlaneseq
  %v2100 = vshrl.u32 %v2099, 7
  %v2101 = vsub.s32 0, %v2100
  %v2102 = vrot.slane %v2082, %v2101
  %v2103 = vlaneseq
  %v2104 = vshrl.u32 %v2103, 7
  %v2105 = vsub.s32 0, %v2104
  %v2106 = vrot.slane %v2083, %v2105
  %v2107 = vsel %vm793, %v2106, %v2102
  %v2108 = vsel %vm440, %v2107, 0
  %2110 = vmatprep.subr.mxu0 0.0
  %2111 = vmatpush1.msra.mxu0 %v2084
  %2112 = vmatprep.subr.mxu0 0.0
  %2113 = vmatpush1.msra.mxu0 %v2085
  %2114 = vmatprep.subr.mxu0 0.0
  %2115 = vmatpush1.msra.mxu0 %v2086
  %2116 = vmatprep.subr.mxu0 0.0
  %2117 = vmatpush1.msra.mxu0 %v2087
  %2118 = vmatprep.subr.mxu0 0.0
  %2119 = vmatpush1.msra.mxu0 %v2088
  %2120 = vmatprep.subr.mxu0 0.0
  %2121 = vmatpush1.msra.mxu0 %v2089
  %2122 = vmatprep.subr.mxu0 0.0
  %2123 = vmatpush1.msra.mxu0 %v2090
  %2124 = vmatprep.subr.mxu0 0.0
  %2125 = vmatpush1.msra.mxu0 %v2091
  %2126 = vmatprep.subr.mxu0 0.0
  %2127 = vmatpush1.msra.mxu0 0.0
  %2128 = vmatprep.subr.mxu0 0.0
  %2129 = vmatpush1.msra.mxu0 0.0
  %2130 = vmatprep.subr.mxu0 0.0
  %2131 = vmatpush1.msra.mxu0 0.0
  %2132 = vmatprep.subr.mxu0 0.0
  %2133 = vmatpush1.msra.mxu0 0.0
  %2134 = vmatprep.subr.mxu0 0.0
  %2135 = vmatpush1.msra.mxu0 0.0
  %2136 = vmatprep.subr.mxu0 0.0
  %2137 = vmatpush1.msra.mxu0 0.0
  %2138 = vmatprep.subr.mxu0 0.0
  %2139 = vmatpush1.msra.mxu0 0.0
  %2140 = vmatprep.subr.mxu0 0.0
  %2141 = vmatpush1.msra.mxu0 0.0
  %2142 = vmatprep.subr.mxu0 0.0
  %2143 = vmatpush1.msra.mxu0 0.0
  %2144 = vmatprep.subr.mxu0 0.0
  %2145 = vmatpush1.msra.mxu0 0.0
  %2146 = vmatprep.subr.mxu0 0.0
  %2147 = vmatpush1.msra.mxu0 0.0
  %2148 = vmatprep.subr.mxu0 0.0
  %2149 = vmatpush1.msra.mxu0 0.0
  %2150 = vmatprep.subr.mxu0 0.0
  %2151 = vmatpush1.msra.mxu0 0.0
  %2152 = vmatprep.subr.mxu0 0.0
  %2153 = vmatpush1.msra.mxu0 0.0
  %2154 = vmatprep.subr.mxu0 0.0
  %2155 = vmatpush1.msra.mxu0 0.0
  %2156 = vmatprep.subr.mxu0 0.0
  %2157 = vmatpush1.msra.mxu0 0.0
  %2158 = vmatprep.subr.mxu0 0.0
  %2159 = vmatpush1.msra.mxu0 0.0
  %2160 = vmatprep.subr.mxu0 0.0
  %2161 = vmatpush1.msra.mxu0 0.0
  %2162 = vmatprep.subr.mxu0 0.0
  %2163 = vmatpush1.msra.mxu0 0.0
  %2164 = vmatprep.subr.mxu0 0.0
  %2165 = vmatpush1.msra.mxu0 0.0
  %2166 = vmatprep.subr.mxu0 0.0
  %2167 = vmatpush1.msra.mxu0 0.0
  %2168 = vmatprep.subr.mxu0 0.0
  %2169 = vmatpush1.msra.mxu0 0.0
  %2170 = vmatprep.subr.mxu0 0.0
  %2171 = vmatpush1.msra.mxu0 0.0
  %2172 = vmatprep.subr.mxu0 0.0
  %2173 = vmatpush1.msra.mxu0 0.0
  %2174 = vmatprep.mubr.f32.mxu0 0.0
  %2175 = vmatmul.mubr.f32.gmra.mrb[0].mxu0 %v2108
  %v2176 = vpop.f32.mrb[0].mxu0
  %v2177 = vadd.f32 %v2096, %v2176
  %v2178 = vpop.f32.mrb[0].mxu0
  %2179 = vdwg.mxu0
  %v2180 = vlaneseq
  %v2181 = vand.u32 %v2180, 127
  %vm2182 = vcmp.lt.s32.totalorder %v2181, 8
  %v2183 = vtanh.pop %v2177
  %v2184 = vsel %vm2182, %v2183, %v2177
  %vm2185 = vcmask 517120
  %2186 = vst.msk [vmem:[%s3] sm:$0x3] %vm2185, %v2184
  // Predicated region
  $region14: #{latent_state_encoder_forward.1} parent=0 // pred_check
    _
  $region15: #{latent_state_encoder_forward.1} parent=0 // pred_check_branch
    %2188 = sbr.rel (0) target = $region17
  $region16: #{latent_state_encoder_forward.1} parent=0 // pred_region
    _
  $region17: #{latent_state_encoder_forward.1} parent=0 // pred_fallthru
    _
  // Predicated region
  $region18: #{latent_state_encoder_forward.1} parent=0 // pred_check
    _
  $region19: #{latent_state_encoder_forward.1} parent=0 // pred_check_branch
    %2190 = sbr.rel (0) target = $region21
  $region20: #{latent_state_encoder_forward.1} parent=0 // pred_region
    _
  $region21: #{latent_state_encoder_forward.1} parent=0 // pred_fallthru
    _

</llo_original>
